<compile_context>
chip_gen: v5e
topology: v5e:2x2
jax: 0.10.0
libtpu: 0.0.40
codegen_flags: <defaults>
</compile_context>

<pallas_src>
import jax
import jax.numpy as jnp
from jax.experimental import pallas as pl
from jax.experimental.pallas import tpu as pltpu


# ----------------------------------------------------------------------------
# Model dimensions (synthetic backbone)
# ----------------------------------------------------------------------------
CIN = 4          # input channels
C1 = 32          # conv1 output channels
C2 = 32          # conv2 output channels
NCLS = 7         # FER classes
H = W = 16       # spatial size
HW = H * W       # flattened spatial size per image (256)


def _same_pad_mask(h, w):
    """(9, h*w) {0,1} mask: mask[t, p] == 1 iff 3x3 tap t at flattened position
    p stays inside the image (SAME zero padding).  t = (dy+1)*3 + (dx+1)."""
    t = jnp.arange(9)
    dy = t // 3 - 1
    dx = t % 3 - 1
    p = jnp.arange(h * w)
    py = p // w
    px = p % w
    valid = ((py[None, :] + dy[:, None] >= 0) & (py[None, :] + dy[:, None] < h) &
             (px[None, :] + dx[:, None] >= 0) & (px[None, :] + dx[:, None] < w))
    return valid.astype(jnp.float32)


# ----------------------------------------------------------------------------
# Fused forward-pass kernel (whole batch in one grid step)
# ----------------------------------------------------------------------------
def fer_fused_kernel(x_ref, mask_ref, w1_ref, b1_ref, w2_ref, b2_ref,
                     wh_ref, bh_ref, o_ref, s1_ref, s2_ref):
    """conv3x3+ReLU -> conv3x3+ReLU -> GAP -> linear head, all in VMEM.

    x_ref   : (CIN, N*HW)    channels-first, batch folded into lanes (f32)
    mask_ref: (9, N*HW)      {0,1} SAME-padding mask per 3x3 tap (f32)
    w1_ref  : (C1, 9*CIN)    conv1 weight, column = t*CIN + c  (bf16)
    b1_ref  : (C1, 1)        conv1 bias (f32)
    w2_ref  : (C2, 9*C1)     conv2 weight (bf16)
    b2_ref  : (C2, 1)        conv2 bias (f32)
    wh_ref  : (C2, NCLS)     head weight (f32)
    bh_ref  : (1, NCLS)      head bias (f32)
    o_ref   : (N, NCLS)      logits, single block / single writeback
    s1_ref  : (9*CIN, N*HW)  conv1 tap-stacked operand scratch (f32: keeps the
                             4-row tap stores on the plain f32 store path)
    s2_ref  : (9*C1, N*HW)   conv2 tap-stacked operand scratch (bf16, 32-row
                             aligned stores)
    """
    nhw = x_ref.shape[1]

    def stack_taps(src, s_ref, cin):
        # For every 3x3 tap t, write the circularly-rolled (XLU) and
        # SAME-mask-multiplied (one f32 vmul) copy of `src` into scratch rows
        # [t*cin, (t+1)*cin).  Wrapped lanes (across row / image / batch
        # boundaries) are exactly the masked-out lanes, so a circular roll is
        # numerically identical to a zero-filled shift.
        for t in range(9):
            d = (t // 3 - 1) * W + (t % 3 - 1)           # flattened tap offset
            rolled = pltpu.roll(src, (-d) % nhw, axis=1) if d else src
            masked = rolled * mask_ref[t:t + 1, :]       # f32 mul, pre-bf16 cast
            s_ref[t * cin:(t + 1) * cin, :] = masked.astype(s_ref.dtype)

    # ---- conv1 (single MXU dot, K = 9*CIN = 36) + bias + ReLU ---------------
    stack_taps(x_ref[...], s1_ref, CIN)
    h1 = jnp.dot(w1_ref[...], s1_ref[...].astype(jnp.bfloat16),
                 preferred_element_type=jnp.float32)     # (C1, N*HW) f32
    h1 = jnp.maximum(h1 + b1_ref[...], 0.0)

    # ---- conv2 (single MXU dot, K = 9*C1 = 288) + bias + ReLU ---------------
    stack_taps(h1, s2_ref, C1)
    h2 = jnp.dot(w2_ref[...], s2_ref[...],
                 preferred_element_type=jnp.float32)     # (C2, N*HW) f32
    h2 = jnp.maximum(h2 + b2_ref[...], 0.0)

    # ---- GAP + linear head; all logits land in the one (N, NCLS) block ------
    n = o_ref.shape[0]
    inv_hw = 1.0 / float(HW)
    for b in range(n):   # static, tiny: per-image lane reduce + VPU epilogue
        gap_b = jnp.sum(h2[:, b * HW:(b + 1) * HW], axis=1,
                        keepdims=True) * inv_hw                    # (C2, 1)
        row = jnp.sum(gap_b * wh_ref[...], axis=0, keepdims=True) + bh_ref[...]
        o_ref[b:b + 1, :] = row.astype(o_ref.dtype)


# ----------------------------------------------------------------------------
# Parameters (deterministic, in-script).  Conv weights are pre-stacked
# lane-dense as (Cout, 9*Cin); for real PyTorch conv weights of shape
# (Cout, Cin, 3, 3) this layout is w.transpose(0, 2, 3, 1).reshape(Cout, 9*Cin).
# ----------------------------------------------------------------------------
def init_params(key, cin=CIN, c1=C1, c2=C2, num_classes=NCLS):
    ks = jax.random.split(key, 6)
    s1 = 1.0 / jnp.sqrt(9.0 * cin)
    s2 = 1.0 / jnp.sqrt(9.0 * c1)
    s3 = 1.0 / jnp.sqrt(float(c2))
    return dict(
        w1=(jax.random.normal(ks[0], (c1, 9 * cin), jnp.float32) * s1
            ).astype(jnp.bfloat16),
        b1=jax.random.normal(ks[1], (c1, 1), jnp.float32) * 0.01,
        w2=(jax.random.normal(ks[2], (c2, 9 * c1), jnp.float32) * s2
            ).astype(jnp.bfloat16),
        b2=jax.random.normal(ks[3], (c2, 1), jnp.float32) * 0.01,
        wh=jax.random.normal(ks[4], (c2, num_classes), jnp.float32) * s3,
        bh=jax.random.normal(ks[5], (1, num_classes), jnp.float32) * 0.01,
    )


# ----------------------------------------------------------------------------
# Forward wrapper: single fused pallas_call, grid=(1,) (whole batch per step).
# ----------------------------------------------------------------------------
@jax.jit
def fer_model_forward(x_nchw, params):
    n, cin, h, w = x_nchw.shape
    assert (cin, h, w) == (CIN, H, W)
    nhw = n * h * w
    # (N, C, H, W) -> (C, N*H*W): lane-dense layout (layout plumbing only);
    # the batch rides in the MXU N-dimension so one matmul pair does all of it.
    x2 = x_nchw.astype(jnp.float32).transpose(1, 0, 2, 3).reshape(cin, nhw)
    mask = jnp.tile(_same_pad_mask(h, w), (1, n))        # (9, N*HW), const-folded

    out = pl.pallas_call(
        fer_fused_kernel,
        out_shape=jax.ShapeDtypeStruct((n, NCLS), jnp.float32),
        grid_spec=pltpu.PrefetchScalarGridSpec(
            num_scalar_prefetch=0,
            grid=(1,),                                   # single fused step
            in_specs=[
                pl.BlockSpec((cin, nhw), lambda i: (0, 0)),
                pl.BlockSpec((9, nhw), lambda i: (0, 0)),
                pl.BlockSpec((C1, 9 * CIN), lambda i: (0, 0)),
                pl.BlockSpec((C1, 1), lambda i: (0, 0)),
                pl.BlockSpec((C2, 9 * C1), lambda i: (0, 0)),
                pl.BlockSpec((C2, 1), lambda i: (0, 0)),
                pl.BlockSpec((C2, NCLS), lambda i: (0, 0)),
                pl.BlockSpec((1, NCLS), lambda i: (0, 0)),
            ],
            out_specs=pl.BlockSpec((n, NCLS), lambda i: (0, 0)),
            scratch_shapes=[
                pltpu.VMEM((9 * CIN, nhw), jnp.float32),     # conv1 tap stack
                pltpu.VMEM((9 * C1, nhw), jnp.bfloat16),     # conv2 tap stack
            ],
        ),
        # One sub-microsecond step: no megacore "parallel" split (it would only
        # add cross-TC coordination + duplicated weight DMAs at this size).
        compiler_params=pltpu.CompilerParams(
            dimension_semantics=("arbitrary",)),
    )(x2, mask, params["w1"], params["b1"], params["w2"], params["b2"],
      params["wh"], params["bh"])
    return out                                           # (N, 7) logits


# ----------------------------------------------------------------------------
# Pure-JAX reference, quantization-matched to the kernel (bf16 operands,
# f32 accumulation) for a numerical sanity check.
# ----------------------------------------------------------------------------
def ref_forward(x_nchw, params):
    f32 = jnp.float32
    hp = jax.lax.Precision.HIGHEST
    dn = ("NCHW", "OIHW", "NCHW")
    x = x_nchw.astype(jnp.bfloat16).astype(f32)
    w1 = params["w1"].astype(f32).reshape(C1, 3, 3, CIN).transpose(0, 3, 1, 2)
    w2 = params["w2"].astype(f32).reshape(C2, 3, 3, C1).transpose(0, 3, 1, 2)
    h1 = jax.lax.conv_general_dilated(x, w1, (1, 1), "SAME",
                                      dimension_numbers=dn, precision=hp)
    h1 = jnp.maximum(h1 + params["b1"].reshape(1, C1, 1, 1), 0.0)
    h1 = h1.astype(jnp.bfloat16).astype(f32)
    h2 = jax.lax.conv_general_dilated(h1, w2, (1, 1), "SAME",
                                      dimension_numbers=dn, precision=hp)
    h2 = jnp.maximum(h2 + params["b2"].reshape(1, C2, 1, 1), 0.0)
    gap = h2.mean(axis=(2, 3))                            # (N, C2)
    return jnp.dot(gap, params["wh"], precision=hp) + params["bh"]


# ----------------------------------------------------------------------------
if __name__ == "__main__":
    key = jax.random.PRNGKey(0)
    k_x, k_p = jax.random.split(key)

    N = 2
    x = jax.random.normal(k_x, (N, CIN, H, W), jnp.float32)   # NCHW, like torch
    params = init_params(k_p)

    logits = fer_model_forward(x, params)
    jax.block_until_ready(logits)

    assert logits.shape == (N, NCLS), logits.shape
    assert logits.dtype == jnp.float32

    # Numerical sanity check against the quantization-matched reference.
    ref = ref_forward(x, params)
    max_err = float(jnp.max(jnp.abs(logits - ref)))
    assert max_err < 5e-3, f"max |kernel - ref| = {max_err}"

    print("KERNEL_OK")
</pallas_src>

<mosaic_0001>
module attributes {stable_mosaic.version = 11 : i64} {
  func.func @fer_fused_kernel(%arg0: i32, %arg1: memref<4x512xf32, #tpu.memory_space<vmem>>, %arg2: memref<9x512xf32, #tpu.memory_space<vmem>>, %arg3: memref<32x36xbf16, #tpu.memory_space<vmem>>, %arg4: memref<32x1xf32, #tpu.memory_space<vmem>>, %arg5: memref<32x288xbf16, #tpu.memory_space<vmem>>, %arg6: memref<32x1xf32, #tpu.memory_space<vmem>>, %arg7: memref<32x7xf32, #tpu.memory_space<vmem>>, %arg8: memref<1x7xf32, #tpu.memory_space<vmem>>, %arg9: memref<2x7xf32, #tpu.memory_space<vmem>>, %arg10: memref<36x512xf32, #tpu.memory_space<vmem>>, %arg11: memref<288x512xbf16, #tpu.memory_space<vmem>>) attributes {dimension_semantics = [#tpu.dimension_semantics<arbitrary>], iteration_bounds = array<i64: 1>, scalar_prefetch = 0 : i64, scratch_operands = 2 : i64, tpu.core_type = #tpu.core_type<tc>, window_params = [{pipeline_mode = #tpu.pipeline_mode<synchronous>, transform_indices = @transform_0, window_bounds = array<i64: 4, 512>}, {pipeline_mode = #tpu.pipeline_mode<synchronous>, transform_indices = @transform_1, window_bounds = array<i64: 9, 512>}, {pipeline_mode = #tpu.pipeline_mode<synchronous>, transform_indices = @transform_2, window_bounds = array<i64: 32, 36>}, {pipeline_mode = #tpu.pipeline_mode<synchronous>, transform_indices = @transform_3, window_bounds = array<i64: 32, 1>}, {pipeline_mode = #tpu.pipeline_mode<synchronous>, transform_indices = @transform_4, window_bounds = array<i64: 32, 288>}, {pipeline_mode = #tpu.pipeline_mode<synchronous>, transform_indices = @transform_5, window_bounds = array<i64: 32, 1>}, {pipeline_mode = #tpu.pipeline_mode<synchronous>, transform_indices = @transform_6, window_bounds = array<i64: 32, 7>}, {pipeline_mode = #tpu.pipeline_mode<synchronous>, transform_indices = @transform_7, window_bounds = array<i64: 1, 7>}, {pipeline_mode = #tpu.pipeline_mode<synchronous>, transform_indices = @transform_8, window_bounds = array<i64: 2, 7>}]} {
    %c0 = arith.constant 0 : index
    %c0_0 = arith.constant 0 : index
    %0 = vector.load %arg1[%c0, %c0_0] : memref<4x512xf32, #tpu.memory_space<vmem>>, vector<4x512xf32>
    %c17_i32 = arith.constant 17 : i32
    %1 = tpu.dynamic_rotate %0 by %c17_i32 dim 1 : vector<4x512xf32>, i32 -> vector<4x512xf32>
    %c0_1 = arith.constant 0 : index
    %c0_2 = arith.constant 0 : index
    %2 = vector.load %arg2[%c0_1, %c0_2] : memref<9x512xf32, #tpu.memory_space<vmem>>, vector<1x512xf32>
    %3 = vector.broadcast %2 : vector<1x512xf32> to vector<4x512xf32>
    %4 = arith.mulf %1, %3 : vector<4x512xf32>
    %c0_3 = arith.constant 0 : index
    %c0_4 = arith.constant 0 : index
    %5 = vector.load %arg10[%c0_3, %c0_4] : memref<36x512xf32, #tpu.memory_space<vmem>>, vector<4x512xf32>
    tpu.vector_store %arg10[%c0_3, %c0_4], %4 {strides = array<i32>} : memref<36x512xf32, #tpu.memory_space<vmem>>, vector<4x512xf32>,
    %c16_i32 = arith.constant 16 : i32
    %6 = tpu.dynamic_rotate %0 by %c16_i32 dim 1 : vector<4x512xf32>, i32 -> vector<4x512xf32>
    %c1 = arith.constant 1 : index
    %c0_5 = arith.constant 0 : index
    %7 = vector.load %arg2[%c1, %c0_5] : memref<9x512xf32, #tpu.memory_space<vmem>>, vector<1x512xf32>
    %8 = vector.broadcast %7 : vector<1x512xf32> to vector<4x512xf32>
    %9 = arith.mulf %6, %8 : vector<4x512xf32>
    %c4 = arith.constant 4 : index
    %c0_6 = arith.constant 0 : index
    %10 = vector.load %arg10[%c4, %c0_6] : memref<36x512xf32, #tpu.memory_space<vmem>>, vector<4x512xf32>
    tpu.vector_store %arg10[%c4, %c0_6], %9 {strides = array<i32>} : memref<36x512xf32, #tpu.memory_space<vmem>>, vector<4x512xf32>,
    %c15_i32 = arith.constant 15 : i32
    %11 = tpu.dynamic_rotate %0 by %c15_i32 dim 1 : vector<4x512xf32>, i32 -> vector<4x512xf32>
    %c2 = arith.constant 2 : index
    %c0_7 = arith.constant 0 : index
    %12 = vector.load %arg2[%c2, %c0_7] : memref<9x512xf32, #tpu.memory_space<vmem>>, vector<1x512xf32>
    %13 = vector.broadcast %12 : vector<1x512xf32> to vector<4x512xf32>
    %14 = arith.mulf %11, %13 : vector<4x512xf32>
    %c8 = arith.constant 8 : index
    %c0_8 = arith.constant 0 : index
    %15 = vector.load %arg10[%c8, %c0_8] : memref<36x512xf32, #tpu.memory_space<vmem>>, vector<4x512xf32>
    tpu.vector_store %arg10[%c8, %c0_8], %14 {strides = array<i32>} : memref<36x512xf32, #tpu.memory_space<vmem>>, vector<4x512xf32>,
    %c1_i32 = arith.constant 1 : i32
    %16 = tpu.dynamic_rotate %0 by %c1_i32 dim 1 : vector<4x512xf32>, i32 -> vector<4x512xf32>
    %c3 = arith.constant 3 : index
    %c0_9 = arith.constant 0 : index
    %17 = vector.load %arg2[%c3, %c0_9] : memref<9x512xf32, #tpu.memory_space<vmem>>, vector<1x512xf32>
    %18 = vector.broadcast %17 : vector<1x512xf32> to vector<4x512xf32>
    %19 = arith.mulf %16, %18 : vector<4x512xf32>
    %c12 = arith.constant 12 : index
    %c0_10 = arith.constant 0 : index
    %20 = vector.load %arg10[%c12, %c0_10] : memref<36x512xf32, #tpu.memory_space<vmem>>, vector<4x512xf32>
    tpu.vector_store %arg10[%c12, %c0_10], %19 {strides = array<i32>} : memref<36x512xf32, #tpu.memory_space<vmem>>, vector<4x512xf32>,
    %c4_11 = arith.constant 4 : index
    %c0_12 = arith.constant 0 : index
    %21 = vector.load %arg2[%c4_11, %c0_12] : memref<9x512xf32, #tpu.memory_space<vmem>>, vector<1x512xf32>
    %22 = vector.broadcast %21 : vector<1x512xf32> to vector<4x512xf32>
    %23 = arith.mulf %0, %22 : vector<4x512xf32>
    %c16 = arith.constant 16 : index
    %c0_13 = arith.constant 0 : index
    %24 = vector.load %arg10[%c16, %c0_13] : memref<36x512xf32, #tpu.memory_space<vmem>>, vector<4x512xf32>
    tpu.vector_store %arg10[%c16, %c0_13], %23 {strides = array<i32>} : memref<36x512xf32, #tpu.memory_space<vmem>>, vector<4x512xf32>,
    %c511_i32 = arith.constant 511 : i32
    %25 = tpu.dynamic_rotate %0 by %c511_i32 dim 1 : vector<4x512xf32>, i32 -> vector<4x512xf32>
    %c5 = arith.constant 5 : index
    %c0_14 = arith.constant 0 : index
    %26 = vector.load %arg2[%c5, %c0_14] : memref<9x512xf32, #tpu.memory_space<vmem>>, vector<1x512xf32>
    %27 = vector.broadcast %26 : vector<1x512xf32> to vector<4x512xf32>
    %28 = arith.mulf %25, %27 : vector<4x512xf32>
    %c20 = arith.constant 20 : index
    %c0_15 = arith.constant 0 : index
    %29 = vector.load %arg10[%c20, %c0_15] : memref<36x512xf32, #tpu.memory_space<vmem>>, vector<4x512xf32>
    tpu.vector_store %arg10[%c20, %c0_15], %28 {strides = array<i32>} : memref<36x512xf32, #tpu.memory_space<vmem>>, vector<4x512xf32>,
    %c497_i32 = arith.constant 497 : i32
    %30 = tpu.dynamic_rotate %0 by %c497_i32 dim 1 : vector<4x512xf32>, i32 -> vector<4x512xf32>
    %c6 = arith.constant 6 : index
    %c0_16 = arith.constant 0 : index
    %31 = vector.load %arg2[%c6, %c0_16] : memref<9x512xf32, #tpu.memory_space<vmem>>, vector<1x512xf32>
    %32 = vector.broadcast %31 : vector<1x512xf32> to vector<4x512xf32>
    %33 = arith.mulf %30, %32 : vector<4x512xf32>
    %c24 = arith.constant 24 : index
    %c0_17 = arith.constant 0 : index
    %34 = vector.load %arg10[%c24, %c0_17] : memref<36x512xf32, #tpu.memory_space<vmem>>, vector<4x512xf32>
    tpu.vector_store %arg10[%c24, %c0_17], %33 {strides = array<i32>} : memref<36x512xf32, #tpu.memory_space<vmem>>, vector<4x512xf32>,
    %c496_i32 = arith.constant 496 : i32
    %35 = tpu.dynamic_rotate %0 by %c496_i32 dim 1 : vector<4x512xf32>, i32 -> vector<4x512xf32>
    %c7 = arith.constant 7 : index
    %c0_18 = arith.constant 0 : index
    %36 = vector.load %arg2[%c7, %c0_18] : memref<9x512xf32, #tpu.memory_space<vmem>>, vector<1x512xf32>
    %37 = vector.broadcast %36 : vector<1x512xf32> to vector<4x512xf32>
    %38 = arith.mulf %35, %37 : vector<4x512xf32>
    %c28 = arith.constant 28 : index
    %c0_19 = arith.constant 0 : index
    %39 = vector.load %arg10[%c28, %c0_19] : memref<36x512xf32, #tpu.memory_space<vmem>>, vector<4x512xf32>
    tpu.vector_store %arg10[%c28, %c0_19], %38 {strides = array<i32>} : memref<36x512xf32, #tpu.memory_space<vmem>>, vector<4x512xf32>,
    %c495_i32 = arith.constant 495 : i32
    %40 = tpu.dynamic_rotate %0 by %c495_i32 dim 1 : vector<4x512xf32>, i32 -> vector<4x512xf32>
    %c8_20 = arith.constant 8 : index
    %c0_21 = arith.constant 0 : index
    %41 = vector.load %arg2[%c8_20, %c0_21] : memref<9x512xf32, #tpu.memory_space<vmem>>, vector<1x512xf32>
    %42 = vector.broadcast %41 : vector<1x512xf32> to vector<4x512xf32>
    %43 = arith.mulf %40, %42 : vector<4x512xf32>
    %c32 = arith.constant 32 : index
    %c0_22 = arith.constant 0 : index
    %44 = vector.load %arg10[%c32, %c0_22] : memref<36x512xf32, #tpu.memory_space<vmem>>, vector<4x512xf32>
    tpu.vector_store %arg10[%c32, %c0_22], %43 {strides = array<i32>} : memref<36x512xf32, #tpu.memory_space<vmem>>, vector<4x512xf32>,
    %c0_23 = arith.constant 0 : index
    %c0_24 = arith.constant 0 : index
    %45 = vector.load %arg3[%c0_23, %c0_24] : memref<32x36xbf16, #tpu.memory_space<vmem>>, vector<32x36xbf16>
    %c0_25 = arith.constant 0 : index
    %c0_26 = arith.constant 0 : index
    %46 = vector.load %arg10[%c0_25, %c0_26] : memref<36x512xf32, #tpu.memory_space<vmem>>, vector<36x512xf32>
    %47 = arith.truncf %46 : vector<36x512xf32> to vector<36x512xbf16>
    %cst = arith.constant dense<0.000000e+00> : vector<32x512xf32>
    %48 = tpu.matmul %45, %47, %cst {dimension_numbers = #tpu.dot_dimension_numbers<[1], [0], [0], [1], [0, 0, 1, 1], [], []>} : vector<32x36xbf16>, vector<36x512xbf16>, vector<32x512xf32> -> vector<32x512xf32>
    %c0_27 = arith.constant 0 : index
    %c0_28 = arith.constant 0 : index
    %49 = vector.load %arg4[%c0_27, %c0_28] : memref<32x1xf32, #tpu.memory_space<vmem>>, vector<32x1xf32>
    %50 = vector.broadcast %49 : vector<32x1xf32> to vector<32x512xf32>
    %51 = arith.addf %48, %50 : vector<32x512xf32>
    %cst_29 = arith.constant 0.000000e+00 : f32
    %52 = vector.broadcast %cst_29 : f32 to vector<32x512xf32>
    %53 = arith.maximumf %51, %52 : vector<32x512xf32>
    %c17_i32_30 = arith.constant 17 : i32
    %54 = tpu.dynamic_rotate %53 by %c17_i32_30 dim 1 : vector<32x512xf32>, i32 -> vector<32x512xf32>
    %c0_31 = arith.constant 0 : index
    %c0_32 = arith.constant 0 : index
    %55 = vector.load %arg2[%c0_31, %c0_32] : memref<9x512xf32, #tpu.memory_space<vmem>>, vector<1x512xf32>
    %56 = vector.broadcast %55 : vector<1x512xf32> to vector<32x512xf32>
    %57 = arith.mulf %54, %56 : vector<32x512xf32>
    %58 = arith.truncf %57 : vector<32x512xf32> to vector<32x512xbf16>
    %c0_33 = arith.constant 0 : index
    %c0_34 = arith.constant 0 : index
    %59 = vector.load %arg11[%c0_33, %c0_34] : memref<288x512xbf16, #tpu.memory_space<vmem>>, vector<32x512xbf16>
    tpu.vector_store %arg11[%c0_33, %c0_34], %58 {strides = array<i32>} : memref<288x512xbf16, #tpu.memory_space<vmem>>, vector<32x512xbf16>,
    %c16_i32_35 = arith.constant 16 : i32
    %60 = tpu.dynamic_rotate %53 by %c16_i32_35 dim 1 : vector<32x512xf32>, i32 -> vector<32x512xf32>
    %c1_36 = arith.constant 1 : index
    %c0_37 = arith.constant 0 : index
    %61 = vector.load %arg2[%c1_36, %c0_37] : memref<9x512xf32, #tpu.memory_space<vmem>>, vector<1x512xf32>
    %62 = vector.broadcast %61 : vector<1x512xf32> to vector<32x512xf32>
    %63 = arith.mulf %60, %62 : vector<32x512xf32>
    %64 = arith.truncf %63 : vector<32x512xf32> to vector<32x512xbf16>
    %c32_38 = arith.constant 32 : index
    %c0_39 = arith.constant 0 : index
    %65 = vector.load %arg11[%c32_38, %c0_39] : memref<288x512xbf16, #tpu.memory_space<vmem>>, vector<32x512xbf16>
    tpu.vector_store %arg11[%c32_38, %c0_39], %64 {strides = array<i32>} : memref<288x512xbf16, #tpu.memory_space<vmem>>, vector<32x512xbf16>,
    %c15_i32_40 = arith.constant 15 : i32
    %66 = tpu.dynamic_rotate %53 by %c15_i32_40 dim 1 : vector<32x512xf32>, i32 -> vector<32x512xf32>
    %c2_41 = arith.constant 2 : index
    %c0_42 = arith.constant 0 : index
    %67 = vector.load %arg2[%c2_41, %c0_42] : memref<9x512xf32, #tpu.memory_space<vmem>>, vector<1x512xf32>
    %68 = vector.broadcast %67 : vector<1x512xf32> to vector<32x512xf32>
    %69 = arith.mulf %66, %68 : vector<32x512xf32>
    %70 = arith.truncf %69 : vector<32x512xf32> to vector<32x512xbf16>
    %c64 = arith.constant 64 : index
    %c0_43 = arith.constant 0 : index
    %71 = vector.load %arg11[%c64, %c0_43] : memref<288x512xbf16, #tpu.memory_space<vmem>>, vector<32x512xbf16>
    tpu.vector_store %arg11[%c64, %c0_43], %70 {strides = array<i32>} : memref<288x512xbf16, #tpu.memory_space<vmem>>, vector<32x512xbf16>,
    %c1_i32_44 = arith.constant 1 : i32
    %72 = tpu.dynamic_rotate %53 by %c1_i32_44 dim 1 : vector<32x512xf32>, i32 -> vector<32x512xf32>
    %c3_45 = arith.constant 3 : index
    %c0_46 = arith.constant 0 : index
    %73 = vector.load %arg2[%c3_45, %c0_46] : memref<9x512xf32, #tpu.memory_space<vmem>>, vector<1x512xf32>
    %74 = vector.broadcast %73 : vector<1x512xf32> to vector<32x512xf32>
    %75 = arith.mulf %72, %74 : vector<32x512xf32>
    %76 = arith.truncf %75 : vector<32x512xf32> to vector<32x512xbf16>
    %c96 = arith.constant 96 : index
    %c0_47 = arith.constant 0 : index
    %77 = vector.load %arg11[%c96, %c0_47] : memref<288x512xbf16, #tpu.memory_space<vmem>>, vector<32x512xbf16>
    tpu.vector_store %arg11[%c96, %c0_47], %76 {strides = array<i32>} : memref<288x512xbf16, #tpu.memory_space<vmem>>, vector<32x512xbf16>,
    %c4_48 = arith.constant 4 : index
    %c0_49 = arith.constant 0 : index
    %78 = vector.load %arg2[%c4_48, %c0_49] : memref<9x512xf32, #tpu.memory_space<vmem>>, vector<1x512xf32>
    %79 = vector.broadcast %78 : vector<1x512xf32> to vector<32x512xf32>
    %80 = arith.mulf %53, %79 : vector<32x512xf32>
    %81 = arith.truncf %80 : vector<32x512xf32> to vector<32x512xbf16>
    %c128 = arith.constant 128 : index
    %c0_50 = arith.constant 0 : index
    %82 = vector.load %arg11[%c128, %c0_50] : memref<288x512xbf16, #tpu.memory_space<vmem>>, vector<32x512xbf16>
    tpu.vector_store %arg11[%c128, %c0_50], %81 {strides = array<i32>} : memref<288x512xbf16, #tpu.memory_space<vmem>>, vector<32x512xbf16>,
    %c511_i32_51 = arith.constant 511 : i32
    %83 = tpu.dynamic_rotate %53 by %c511_i32_51 dim 1 : vector<32x512xf32>, i32 -> vector<32x512xf32>
    %c5_52 = arith.constant 5 : index
    %c0_53 = arith.constant 0 : index
    %84 = vector.load %arg2[%c5_52, %c0_53] : memref<9x512xf32, #tpu.memory_space<vmem>>, vector<1x512xf32>
    %85 = vector.broadcast %84 : vector<1x512xf32> to vector<32x512xf32>
    %86 = arith.mulf %83, %85 : vector<32x512xf32>
    %87 = arith.truncf %86 : vector<32x512xf32> to vector<32x512xbf16>
    %c160 = arith.constant 160 : index
    %c0_54 = arith.constant 0 : index
    %88 = vector.load %arg11[%c160, %c0_54] : memref<288x512xbf16, #tpu.memory_space<vmem>>, vector<32x512xbf16>
    tpu.vector_store %arg11[%c160, %c0_54], %87 {strides = array<i32>} : memref<288x512xbf16, #tpu.memory_space<vmem>>, vector<32x512xbf16>,
    %c497_i32_55 = arith.constant 497 : i32
    %89 = tpu.dynamic_rotate %53 by %c497_i32_55 dim 1 : vector<32x512xf32>, i32 -> vector<32x512xf32>
    %c6_56 = arith.constant 6 : index
    %c0_57 = arith.constant 0 : index
    %90 = vector.load %arg2[%c6_56, %c0_57] : memref<9x512xf32, #tpu.memory_space<vmem>>, vector<1x512xf32>
    %91 = vector.broadcast %90 : vector<1x512xf32> to vector<32x512xf32>
    %92 = arith.mulf %89, %91 : vector<32x512xf32>
    %93 = arith.truncf %92 : vector<32x512xf32> to vector<32x512xbf16>
    %c192 = arith.constant 192 : index
    %c0_58 = arith.constant 0 : index
    %94 = vector.load %arg11[%c192, %c0_58] : memref<288x512xbf16, #tpu.memory_space<vmem>>, vector<32x512xbf16>
    tpu.vector_store %arg11[%c192, %c0_58], %93 {strides = array<i32>} : memref<288x512xbf16, #tpu.memory_space<vmem>>, vector<32x512xbf16>,
    %c496_i32_59 = arith.constant 496 : i32
    %95 = tpu.dynamic_rotate %53 by %c496_i32_59 dim 1 : vector<32x512xf32>, i32 -> vector<32x512xf32>
    %c7_60 = arith.constant 7 : index
    %c0_61 = arith.constant 0 : index
    %96 = vector.load %arg2[%c7_60, %c0_61] : memref<9x512xf32, #tpu.memory_space<vmem>>, vector<1x512xf32>
    %97 = vector.broadcast %96 : vector<1x512xf32> to vector<32x512xf32>
    %98 = arith.mulf %95, %97 : vector<32x512xf32>
    %99 = arith.truncf %98 : vector<32x512xf32> to vector<32x512xbf16>
    %c224 = arith.constant 224 : index
    %c0_62 = arith.constant 0 : index
    %100 = vector.load %arg11[%c224, %c0_62] : memref<288x512xbf16, #tpu.memory_space<vmem>>, vector<32x512xbf16>
    tpu.vector_store %arg11[%c224, %c0_62], %99 {strides = array<i32>} : memref<288x512xbf16, #tpu.memory_space<vmem>>, vector<32x512xbf16>,
    %c495_i32_63 = arith.constant 495 : i32
    %101 = tpu.dynamic_rotate %53 by %c495_i32_63 dim 1 : vector<32x512xf32>, i32 -> vector<32x512xf32>
    %c8_64 = arith.constant 8 : index
    %c0_65 = arith.constant 0 : index
    %102 = vector.load %arg2[%c8_64, %c0_65] : memref<9x512xf32, #tpu.memory_space<vmem>>, vector<1x512xf32>
    %103 = vector.broadcast %102 : vector<1x512xf32> to vector<32x512xf32>
    %104 = arith.mulf %101, %103 : vector<32x512xf32>
    %105 = arith.truncf %104 : vector<32x512xf32> to vector<32x512xbf16>
    %c256 = arith.constant 256 : index
    %c0_66 = arith.constant 0 : index
    %106 = vector.load %arg11[%c256, %c0_66] : memref<288x512xbf16, #tpu.memory_space<vmem>>, vector<32x512xbf16>
    tpu.vector_store %arg11[%c256, %c0_66], %105 {strides = array<i32>} : memref<288x512xbf16, #tpu.memory_space<vmem>>, vector<32x512xbf16>,
    %c0_67 = arith.constant 0 : index
    %c0_68 = arith.constant 0 : index
    %107 = vector.load %arg5[%c0_67, %c0_68] : memref<32x288xbf16, #tpu.memory_space<vmem>>, vector<32x288xbf16>
    %c0_69 = arith.constant 0 : index
    %c0_70 = arith.constant 0 : index
    %108 = vector.load %arg11[%c0_69, %c0_70] : memref<288x512xbf16, #tpu.memory_space<vmem>>, vector<288x512xbf16>
    %cst_71 = arith.constant dense<0.000000e+00> : vector<32x512xf32>
    %109 = tpu.matmul %107, %108, %cst_71 {dimension_numbers = #tpu.dot_dimension_numbers<[1], [0], [0], [1], [0, 0, 1, 1], [], []>} : vector<32x288xbf16>, vector<288x512xbf16>, vector<32x512xf32> -> vector<32x512xf32>
    %c0_72 = arith.constant 0 : index
    %c0_73 = arith.constant 0 : index
    %110 = vector.load %arg6[%c0_72, %c0_73] : memref<32x1xf32, #tpu.memory_space<vmem>>, vector<32x1xf32>
    %111 = vector.broadcast %110 : vector<32x1xf32> to vector<32x512xf32>
    %112 = arith.addf %109, %111 : vector<32x512xf32>
    %cst_74 = arith.constant 0.000000e+00 : f32
    %113 = vector.broadcast %cst_74 : f32 to vector<32x512xf32>
    %114 = arith.maximumf %112, %113 : vector<32x512xf32>
    %115 = vector.extract_strided_slice %114 {offsets = [0, 0], sizes = [32, 256], strides = [1, 1]} : vector<32x512xf32> to vector<32x256xf32>
    %cst_75 = arith.constant dense<0.000000e+00> : vector<32xf32>
    %116 = vector.multi_reduction <add>, %115, %cst_75 [1] : vector<32x256xf32> to vector<32xf32>
    %117 = vector.shape_cast %116 : vector<32xf32> to vector<32x1xf32>
    %cst_76 = arith.constant 3.906250e-03 : f32
    %118 = vector.broadcast %cst_76 : f32 to vector<32x1xf32>
    %119 = arith.mulf %117, %118 : vector<32x1xf32>
    %c0_77 = arith.constant 0 : index
    %c0_78 = arith.constant 0 : index
    %120 = vector.load %arg7[%c0_77, %c0_78] : memref<32x7xf32, #tpu.memory_space<vmem>>, vector<32x7xf32>
    %121 = vector.broadcast %119 : vector<32x1xf32> to vector<32x7xf32>
    %122 = arith.mulf %121, %120 : vector<32x7xf32>
    %cst_79 = arith.constant dense<0.000000e+00> : vector<7xf32>
    %123 = vector.multi_reduction <add>, %122, %cst_79 [0] : vector<32x7xf32> to vector<7xf32>
    %124 = vector.shape_cast %123 : vector<7xf32> to vector<1x7xf32>
    %c0_80 = arith.constant 0 : index
    %c0_81 = arith.constant 0 : index
    %125 = vector.load %arg8[%c0_80, %c0_81] : memref<1x7xf32, #tpu.memory_space<vmem>>, vector<1x7xf32>
    %126 = arith.addf %124, %125 : vector<1x7xf32>
    %c0_82 = arith.constant 0 : index
    %c0_83 = arith.constant 0 : index
    %127 = vector.load %arg9[%c0_82, %c0_83] : memref<2x7xf32, #tpu.memory_space<vmem>>, vector<1x7xf32>
    tpu.vector_store %arg9[%c0_82, %c0_83], %126 {strides = array<i32>} : memref<2x7xf32, #tpu.memory_space<vmem>>, vector<1x7xf32>,
    %128 = vector.extract_strided_slice %114 {offsets = [0, 256], sizes = [32, 256], strides = [1, 1]} : vector<32x512xf32> to vector<32x256xf32>
    %cst_84 = arith.constant dense<0.000000e+00> : vector<32xf32>
    %129 = vector.multi_reduction <add>, %128, %cst_84 [1] : vector<32x256xf32> to vector<32xf32>
    %130 = vector.shape_cast %129 : vector<32xf32> to vector<32x1xf32>
    %cst_85 = arith.constant 3.906250e-03 : f32
    %131 = vector.broadcast %cst_85 : f32 to vector<32x1xf32>
    %132 = arith.mulf %130, %131 : vector<32x1xf32>
    %c0_86 = arith.constant 0 : index
    %c0_87 = arith.constant 0 : index
    %133 = vector.load %arg7[%c0_86, %c0_87] : memref<32x7xf32, #tpu.memory_space<vmem>>, vector<32x7xf32>
    %134 = vector.broadcast %132 : vector<32x1xf32> to vector<32x7xf32>
    %135 = arith.mulf %134, %133 : vector<32x7xf32>
    %cst_88 = arith.constant dense<0.000000e+00> : vector<7xf32>
    %136 = vector.multi_reduction <add>, %135, %cst_88 [0] : vector<32x7xf32> to vector<7xf32>
    %137 = vector.shape_cast %136 : vector<7xf32> to vector<1x7xf32>
    %c0_89 = arith.constant 0 : index
    %c0_90 = arith.constant 0 : index
    %138 = vector.load %arg8[%c0_89, %c0_90] : memref<1x7xf32, #tpu.memory_space<vmem>>, vector<1x7xf32>
    %139 = arith.addf %137, %138 : vector<1x7xf32>
    %c1_91 = arith.constant 1 : index
    %c0_92 = arith.constant 0 : index
    %140 = vector.load %arg9[%c1_91, %c0_92] : memref<2x7xf32, #tpu.memory_space<vmem>>, vector<1x7xf32>
    tpu.vector_store %arg9[%c1_91, %c0_92], %139 {strides = array<i32>} : memref<2x7xf32, #tpu.memory_space<vmem>>, vector<1x7xf32>,
    return
  }
  func.func @transform_0(%arg0: i32) -> (i32, i32) {
    %c0_i32 = arith.constant 0 : i32
    %c0_i32_0 = arith.constant 0 : i32
    %c0_i32_1 = arith.constant 0 : i32
    return %c0_i32, %c0_i32_0 : i32, i32
  }
  func.func @transform_1(%arg0: i32) -> (i32, i32) {
    %c0_i32 = arith.constant 0 : i32
    %c0_i32_0 = arith.constant 0 : i32
    %c0_i32_1 = arith.constant 0 : i32
    return %c0_i32, %c0_i32_0 : i32, i32
  }
  func.func @transform_2(%arg0: i32) -> (i32, i32) {
    %c0_i32 = arith.constant 0 : i32
    %c0_i32_0 = arith.constant 0 : i32
    %c0_i32_1 = arith.constant 0 : i32
    return %c0_i32, %c0_i32_0 : i32, i32
  }
  func.func @transform_3(%arg0: i32) -> (i32, i32) {
    %c0_i32 = arith.constant 0 : i32
    %c0_i32_0 = arith.constant 0 : i32
    %c0_i32_1 = arith.constant 0 : i32
    return %c0_i32, %c0_i32_0 : i32, i32
  }
  func.func @transform_4(%arg0: i32) -> (i32, i32) {
    %c0_i32 = arith.constant 0 : i32
    %c0_i32_0 = arith.constant 0 : i32
    %c0_i32_1 = arith.constant 0 : i32
    return %c0_i32, %c0_i32_0 : i32, i32
  }
  func.func @transform_5(%arg0: i32) -> (i32, i32) {
    %c0_i32 = arith.constant 0 : i32
    %c0_i32_0 = arith.constant 0 : i32
    %c0_i32_1 = arith.constant 0 : i32
    return %c0_i32, %c0_i32_0 : i32, i32
  }
  func.func @transform_6(%arg0: i32) -> (i32, i32) {
    %c0_i32 = arith.constant 0 : i32
    %c0_i32_0 = arith.constant 0 : i32
    %c0_i32_1 = arith.constant 0 : i32
    return %c0_i32, %c0_i32_0 : i32, i32
  }
  func.func @transform_7(%arg0: i32) -> (i32, i32) {
    %c0_i32 = arith.constant 0 : i32
    %c0_i32_0 = arith.constant 0 : i32
    %c0_i32_1 = arith.constant 0 : i32
    return %c0_i32, %c0_i32_0 : i32, i32
  }
  func.func @transform_8(%arg0: i32) -> (i32, i32) {
    %c0_i32 = arith.constant 0 : i32
    %c0_i32_0 = arith.constant 0 : i32
    %c0_i32_1 = arith.constant 0 : i32
    return %c0_i32, %c0_i32_0 : i32, i32
  }
}

</mosaic_0001>

<llo_original>
// kernel: fer_model_forward.1
$region0: #{fer_model_forward.1}
  #allocation0 [shape = 'u32[]', space=smem, size = 0x4, offset = 0x4, fixed_abs, tag = 'smem constant byte address 0x4 - core index']
  #allocation1 [shape = 'u32[72,128]{1,0:T(1,128)}', space=vmem, size = 0x9000, scoped, tag = 'internal scratch']
  #allocation2 [shape = 'f32[36,512]{1,0:T(8,128)}', space=vmem, size = 0x14000, scoped, tag = 'scratch operand']
  #allocation3 [shape = 'bf16[288,512]{1,0:T(8,128)(2,1)}', space=vmem, size = 0x48000, scoped, tag = 'scratch operand']
  %s0 = inlined_call_operand.vmem [shape: f32[4,512], index: 0, kind: input, shape index: {}]
  %s1 = inlined_call_operand.vmem [shape: f32[9,512], index: 1, kind: input, shape index: {}]
  %s2 = inlined_call_operand.vmem [shape: bf16[32,36], index: 2, kind: input, shape index: {}]
  %s3 = inlined_call_operand.vmem [shape: f32[32,1], index: 3, kind: input, shape index: {}]
  %s4 = inlined_call_operand.vmem [shape: bf16[32,288], index: 4, kind: input, shape index: {}]
  %s5 = inlined_call_operand.vmem [shape: f32[32,1], index: 5, kind: input, shape index: {}]
  %s6 = inlined_call_operand.vmem [shape: f32[32,7], index: 6, kind: input, shape index: {}]
  %s7 = inlined_call_operand.vmem [shape: f32[1,7], index: 7, kind: input, shape index: {}]
  %s8 = inlined_call_operand.hbm [shape: f32[2,7], index: 8, kind: output, shape index: {}]
  %s9 = sld [smem:[#allocation0]]
  $region42: #{fer_model_forward.1} parent=0
    _
  %s11 = ssub.s32 1, %s9
  %s12 = scalar_select 0, %s11, %s9
  $region1: #{fer_model_forward.1} parent=0
    #allocation4 [shape = 'u8[1024]{0}', space=vmem, size = 0x400, scoped, tag = 'output window, operand 0, single buffered']
    #allocation5 [shape = 's32[1]{0}', space=sflag, size = 0x4, scoped, tag = 'scoped memory for fer_model_forward.1']
    %13 = vsyncpa [#allocation5], 0
    // Predicated region
    $region2: #{fer_model_forward.1} parent=1 // pred_check
      _
    $region3: #{fer_model_forward.1} parent=1 // pred_check_branch
      %15 = sbr.rel (0) target = $region5
    $region4: #{fer_model_forward.1} parent=1 // pred_region
      _
    $region5: #{fer_model_forward.1} parent=1 // pred_fallthru
      _
    // Predicated region
    $region6: #{fer_model_forward.1} parent=1 // pred_check
      _
    $region7: #{fer_model_forward.1} parent=1 // pred_check_branch
      %17 = sbr.rel (0) target = $region9
    $region8: #{fer_model_forward.1} parent=1 // pred_region
      _
    $region9: #{fer_model_forward.1} parent=1 // pred_fallthru
      _
    // Predicated region
    $region10: #{fer_model_forward.1} parent=1 // pred_check
      _
    $region11: #{fer_model_forward.1} parent=1 // pred_check_branch
      %19 = sbr.rel (0) target = $region13
    $region12: #{fer_model_forward.1} parent=1 // pred_region
      _
    $region13: #{fer_model_forward.1} parent=1 // pred_fallthru
      _
    // Predicated region
    $region14: #{fer_model_forward.1} parent=1 // pred_check
      _
    $region15: #{fer_model_forward.1} parent=1 // pred_check_branch
      %21 = sbr.rel (0) target = $region17
    $region16: #{fer_model_forward.1} parent=1 // pred_region
      _
    $region17: #{fer_model_forward.1} parent=1 // pred_fallthru
      _
    // Predicated region
    $region18: #{fer_model_forward.1} parent=1 // pred_check
      _
    $region19: #{fer_model_forward.1} parent=1 // pred_check_branch
      %23 = sbr.rel (0) target = $region21
    $region20: #{fer_model_forward.1} parent=1 // pred_region
      _
    $region21: #{fer_model_forward.1} parent=1 // pred_fallthru
      _
    // Predicated region
    $region22: #{fer_model_forward.1} parent=1 // pred_check
      _
    $region23: #{fer_model_forward.1} parent=1 // pred_check_branch
      %25 = sbr.rel (0) target = $region25
    $region24: #{fer_model_forward.1} parent=1 // pred_region
      _
    $region25: #{fer_model_forward.1} parent=1 // pred_fallthru
      _
    // Predicated region
    $region26: #{fer_model_forward.1} parent=1 // pred_check
      _
    $region27: #{fer_model_forward.1} parent=1 // pred_check_branch
      %27 = sbr.rel (0) target = $region29
    $region28: #{fer_model_forward.1} parent=1 // pred_region
      _
    $region29: #{fer_model_forward.1} parent=1 // pred_fallthru
      _
    // Predicated region
    $region30: #{fer_model_forward.1} parent=1 // pred_check
      _
    $region31: #{fer_model_forward.1} parent=1 // pred_check_branch
      %29 = sbr.rel (0) target = $region33
    $region32: #{fer_model_forward.1} parent=1 // pred_region
      _
    $region33: #{fer_model_forward.1} parent=1 // pred_fallthru
      _
    %v31 = vld [vmem:[%s0] sm:$0xff]
    %v32 = vld [vmem:[%s0 + $0x8] sm:$0xff]
    %35 = vst [vmem:[#allocation1] ss:$2 sm:$0xff] %v31
    %s36 = scalar_lea.vmem [#allocation1], 16
    %37 = vst [vmem:[%s36] ss:$2 sm:$0xff] %v32
    %v38 = vld.sshfl [vmem:[#allocation1] sm:$0xff pattern:$0x75316420]
    %v39 = vld.sshfl [vmem:[#allocation1 + $0x8] sm:$0xff pattern:$0x75316420]
    %v40 = vld.sshfl [vmem:[#allocation1 + $0x10] sm:$0xff pattern:$0x75316420]
    %v41 = vld.sshfl [vmem:[#allocation1 + $0x18] sm:$0xff pattern:$0x75316420]
    %46 = vrot.lane.b32.xlu0 %v38, 17
    %v47 = vpop.permute.xlu0 %46
    %48 = vrot.lane.b32.xlu0 %v39, 17
    %v49 = vpop.permute.xlu0 %48
    %50 = vrot.lane.b32.xlu0 %v40, 17
    %v51 = vpop.permute.xlu0 %50
    %52 = vrot.lane.b32.xlu0 %v41, 17
    %v53 = vpop.permute.xlu0 %52
    %v54 = vlaneseq
    %v55 = vand.u32 %v54, 127
    %vm56 = vcmp.lt.s32.totalorder %v55, 17
    %v57 = vsel %vm56, %v51, %v53
    %v58 = vsel %vm56, %v49, %v51
    %v59 = vsel %vm56, %v47, %v49
    %v60 = vsel %vm56, %v53, %v47
    %v61 = vld [vmem:[%s1] ss:$8 sm:$0xf]
    %v63 = vperm.slane %v61, 0
    %v64 = vperm.slane %v61, 1
    %v65 = vperm.slane %v61, 2
    %v66 = vperm.slane %v61, 3
    %v71 = vmul.f32 %v60, %v63
    %v72 = vmul.f32 %v59, %v64
    %v73 = vmul.f32 %v58, %v65
    %v74 = vmul.f32 %v57, %v66
    %75 = vst [vmem:[#allocation2] sm:$0xf] %v71
    %76 = vst [vmem:[#allocation2 + $0x8] sm:$0xf] %v72
    %77 = vst [vmem:[#allocation2 + $0x10] sm:$0xf] %v73
    %78 = vst [vmem:[#allocation2 + $0x18] sm:$0xf] %v74
    %79 = vst [vmem:[#allocation1] ss:$2 sm:$0xff] %v31
    %s80 = scalar_lea.vmem [#allocation1], 16
    %81 = vst [vmem:[%s80] ss:$2 sm:$0xff] %v32
    %v82 = vld.sshfl [vmem:[#allocation1] sm:$0xff pattern:$0x75316420]
    %v83 = vld.sshfl [vmem:[#allocation1 + $0x8] sm:$0xff pattern:$0x75316420]
    %v84 = vld.sshfl [vmem:[#allocation1 + $0x10] sm:$0xff pattern:$0x75316420]
    %v85 = vld.sshfl [vmem:[#allocation1 + $0x18] sm:$0xff pattern:$0x75316420]
    %90 = vrot.lane.b32.xlu0 %v82, 16
    %v91 = vpop.permute.xlu0 %90
    %92 = vrot.lane.b32.xlu0 %v83, 16
    %v93 = vpop.permute.xlu0 %92
    %94 = vrot.lane.b32.xlu0 %v84, 16
    %v95 = vpop.permute.xlu0 %94
    %96 = vrot.lane.b32.xlu0 %v85, 16
    %v97 = vpop.permute.xlu0 %96
    %vm98 = vcmp.lt.s32.totalorder %v55, 16
    %v99 = vsel %vm98, %v95, %v97
    %v100 = vsel %vm98, %v93, %v95
    %v101 = vsel %vm98, %v91, %v93
    %v102 = vsel %vm98, %v97, %v91
    %s103 = scalar_lea.vmem %s1, 1
    %v104 = vld [vmem:[%s103] ss:$8 sm:$0xf]
    %v106 = vperm.slane %v104, 0
    %v107 = vperm.slane %v104, 1
    %v108 = vperm.slane %v104, 2
    %v109 = vperm.slane %v104, 3
    %v114 = vmul.f32 %v102, %v106
    %v115 = vmul.f32 %v101, %v107
    %v116 = vmul.f32 %v100, %v108
    %v117 = vmul.f32 %v99, %v109
    %v122 = vrot.slane %v114, 4
    %v123 = vrot.slane %v115, 4
    %v124 = vrot.slane %v116, 4
    %v125 = vrot.slane %v117, 4
    %130 = vst [vmem:[#allocation2] sm:$0xf0] %v122
    %131 = vst [vmem:[#allocation2 + $0x8] sm:$0xf0] %v123
    %132 = vst [vmem:[#allocation2 + $0x10] sm:$0xf0] %v124
    %133 = vst [vmem:[#allocation2 + $0x18] sm:$0xf0] %v125
    %134 = vst [vmem:[#allocation1] ss:$2 sm:$0xff] %v31
    %s135 = scalar_lea.vmem [#allocation1], 16
    %136 = vst [vmem:[%s135] ss:$2 sm:$0xff] %v32
    %v137 = vld.sshfl [vmem:[#allocation1] sm:$0xff pattern:$0x75316420]
    %v138 = vld.sshfl [vmem:[#allocation1 + $0x8] sm:$0xff pattern:$0x75316420]
    %v139 = vld.sshfl [vmem:[#allocation1 + $0x10] sm:$0xff pattern:$0x75316420]
    %v140 = vld.sshfl [vmem:[#allocation1 + $0x18] sm:$0xff pattern:$0x75316420]
    %145 = vrot.lane.b32.xlu0 %v137, 15
    %v146 = vpop.permute.xlu0 %145
    %147 = vrot.lane.b32.xlu0 %v138, 15
    %v148 = vpop.permute.xlu0 %147
    %149 = vrot.lane.b32.xlu0 %v139, 15
    %v150 = vpop.permute.xlu0 %149
    %151 = vrot.lane.b32.xlu0 %v140, 15
    %v152 = vpop.permute.xlu0 %151
    %vm153 = vcmp.lt.s32.totalorder %v55, 15
    %v154 = vsel %vm153, %v150, %v152
    %v155 = vsel %vm153, %v148, %v150
    %v156 = vsel %vm153, %v146, %v148
    %v157 = vsel %vm153, %v152, %v146
    %s158 = scalar_lea.vmem %s1, 2
    %v159 = vld [vmem:[%s158] ss:$8 sm:$0xf]
    %v161 = vperm.slane %v159, 0
    %v162 = vperm.slane %v159, 1
    %v163 = vperm.slane %v159, 2
    %v164 = vperm.slane %v159, 3
    %v169 = vmul.f32 %v157, %v161
    %v170 = vmul.f32 %v156, %v162
    %v171 = vmul.f32 %v155, %v163
    %v172 = vmul.f32 %v154, %v164
    %173 = vst [vmem:[#allocation2 + $0x20] sm:$0xf] %v169
    %174 = vst [vmem:[#allocation2 + $0x28] sm:$0xf] %v170
    %175 = vst [vmem:[#allocation2 + $0x30] sm:$0xf] %v171
    %176 = vst [vmem:[#allocation2 + $0x38] sm:$0xf] %v172
    %177 = vst [vmem:[#allocation1] ss:$2 sm:$0xff] %v31
    %s178 = scalar_lea.vmem [#allocation1], 16
    %179 = vst [vmem:[%s178] ss:$2 sm:$0xff] %v32
    %v180 = vld.sshfl [vmem:[#allocation1] sm:$0xff pattern:$0x75316420]
    %v181 = vld.sshfl [vmem:[#allocation1 + $0x8] sm:$0xff pattern:$0x75316420]
    %v182 = vld.sshfl [vmem:[#allocation1 + $0x10] sm:$0xff pattern:$0x75316420]
    %v183 = vld.sshfl [vmem:[#allocation1 + $0x18] sm:$0xff pattern:$0x75316420]
    %188 = vrot.lane.b32.xlu0 %v180, 1
    %v189 = vpop.permute.xlu0 %188
    %190 = vrot.lane.b32.xlu0 %v181, 1
    %v191 = vpop.permute.xlu0 %190
    %192 = vrot.lane.b32.xlu0 %v182, 1
    %v193 = vpop.permute.xlu0 %192
    %194 = vrot.lane.b32.xlu0 %v183, 1
    %v195 = vpop.permute.xlu0 %194
    %vm196 = vcmp.lt.s32.totalorder %v55, 1
    %v197 = vsel %vm196, %v193, %v195
    %v198 = vsel %vm196, %v191, %v193
    %v199 = vsel %vm196, %v189, %v191
    %v200 = vsel %vm196, %v195, %v189
    %s201 = scalar_lea.vmem %s1, 3
    %v202 = vld [vmem:[%s201] ss:$8 sm:$0xf]
    %v204 = vperm.slane %v202, 0
    %v205 = vperm.slane %v202, 1
    %v206 = vperm.slane %v202, 2
    %v207 = vperm.slane %v202, 3
    %v212 = vmul.f32 %v200, %v204
    %v213 = vmul.f32 %v199, %v205
    %v214 = vmul.f32 %v198, %v206
    %v215 = vmul.f32 %v197, %v207
    %v220 = vrot.slane %v212, 4
    %v221 = vrot.slane %v213, 4
    %v222 = vrot.slane %v214, 4
    %v223 = vrot.slane %v215, 4
    %228 = vst [vmem:[#allocation2 + $0x20] sm:$0xf0] %v220
    %229 = vst [vmem:[#allocation2 + $0x28] sm:$0xf0] %v221
    %230 = vst [vmem:[#allocation2 + $0x30] sm:$0xf0] %v222
    %231 = vst [vmem:[#allocation2 + $0x38] sm:$0xf0] %v223
    %s232 = scalar_lea.vmem %s1, 4
    %v233 = vld [vmem:[%s232] ss:$8 sm:$0xf]
    %v235 = vperm.slane %v233, 0
    %v236 = vperm.slane %v233, 1
    %v237 = vperm.slane %v233, 2
    %v238 = vperm.slane %v233, 3
    %v239 = vrot.slane %v236, 4
    %v240 = vrot.slane %v238, 4
    %vm241 = vcmask 1043456
    %v242 = vsel %vm241, %v235, %v239
    %v243 = vsel %vm241, %v237, %v240
    %v246 = vmul.f32 %v31, %v242
    %v247 = vmul.f32 %v32, %v243
    %250 = vst [vmem:[#allocation1] ss:$2 sm:$0xff] %v246
    %s251 = scalar_lea.vmem [#allocation1], 16
    %252 = vst [vmem:[%s251] ss:$2 sm:$0xff] %v247
    %v253 = vld.sshfl [vmem:[#allocation1] sm:$0xff pattern:$0x75316420]
    %v254 = vld.sshfl [vmem:[#allocation1 + $0x8] sm:$0xff pattern:$0x75316420]
    %v255 = vld.sshfl [vmem:[#allocation1 + $0x10] sm:$0xff pattern:$0x75316420]
    %v256 = vld.sshfl [vmem:[#allocation1 + $0x18] sm:$0xff pattern:$0x75316420]
    %261 = vst [vmem:[#allocation2 + $0x40] sm:$0xf] %v253
    %262 = vst [vmem:[#allocation2 + $0x48] sm:$0xf] %v254
    %263 = vst [vmem:[#allocation2 + $0x50] sm:$0xf] %v255
    %264 = vst [vmem:[#allocation2 + $0x58] sm:$0xf] %v256
    %265 = vst [vmem:[#allocation1] ss:$2 sm:$0xff] %v31
    %s266 = scalar_lea.vmem [#allocation1], 16
    %267 = vst [vmem:[%s266] ss:$2 sm:$0xff] %v32
    %v268 = vld.sshfl [vmem:[#allocation1] sm:$0xff pattern:$0x75316420]
    %v269 = vld.sshfl [vmem:[#allocation1 + $0x8] sm:$0xff pattern:$0x75316420]
    %v270 = vld.sshfl [vmem:[#allocation1 + $0x10] sm:$0xff pattern:$0x75316420]
    %v271 = vld.sshfl [vmem:[#allocation1 + $0x18] sm:$0xff pattern:$0x75316420]
    %276 = vrot.lane.b32.xlu0 %v268, 127
    %v277 = vpop.permute.xlu0 %276
    %278 = vrot.lane.b32.xlu0 %v269, 127
    %v279 = vpop.permute.xlu0 %278
    %280 = vrot.lane.b32.xlu0 %v270, 127
    %v281 = vpop.permute.xlu0 %280
    %282 = vrot.lane.b32.xlu0 %v271, 127
    %v283 = vpop.permute.xlu0 %282
    %vm284 = vcmp.lt.s32.totalorder %v55, 127
    %v285 = vsel %vm284, %v281, %v283
    %v286 = vsel %vm284, %v279, %v281
    %v287 = vsel %vm284, %v277, %v279
    %v288 = vsel %vm284, %v283, %v277
    %s289 = scalar_lea.vmem %s1, 5
    %v290 = vld [vmem:[%s289] ss:$8 sm:$0xf]
    %v292 = vperm.slane %v290, 0
    %v293 = vperm.slane %v290, 1
    %v294 = vperm.slane %v290, 2
    %v295 = vperm.slane %v290, 3
    %v300 = vmul.f32 %v287, %v292
    %v301 = vmul.f32 %v286, %v293
    %v302 = vmul.f32 %v285, %v294
    %v303 = vmul.f32 %v288, %v295
    %v308 = vrot.slane %v300, 4
    %v309 = vrot.slane %v301, 4
    %v310 = vrot.slane %v302, 4
    %v311 = vrot.slane %v303, 4
    %316 = vst [vmem:[#allocation2 + $0x40] sm:$0xf0] %v308
    %317 = vst [vmem:[#allocation2 + $0x48] sm:$0xf0] %v309
    %318 = vst [vmem:[#allocation2 + $0x50] sm:$0xf0] %v310
    %319 = vst [vmem:[#allocation2 + $0x58] sm:$0xf0] %v311
    %320 = vst [vmem:[#allocation1] ss:$2 sm:$0xff] %v31
    %s321 = scalar_lea.vmem [#allocation1], 16
    %322 = vst [vmem:[%s321] ss:$2 sm:$0xff] %v32
    %v323 = vld.sshfl [vmem:[#allocation1] sm:$0xff pattern:$0x75316420]
    %v324 = vld.sshfl [vmem:[#allocation1 + $0x8] sm:$0xff pattern:$0x75316420]
    %v325 = vld.sshfl [vmem:[#allocation1 + $0x10] sm:$0xff pattern:$0x75316420]
    %v326 = vld.sshfl [vmem:[#allocation1 + $0x18] sm:$0xff pattern:$0x75316420]
    %331 = vrot.lane.b32.xlu0 %v323, 113
    %v332 = vpop.permute.xlu0 %331
    %333 = vrot.lane.b32.xlu0 %v324, 113
    %v334 = vpop.permute.xlu0 %333
    %335 = vrot.lane.b32.xlu0 %v325, 113
    %v336 = vpop.permute.xlu0 %335
    %337 = vrot.lane.b32.xlu0 %v326, 113
    %v338 = vpop.permute.xlu0 %337
    %vm339 = vcmp.lt.s32.totalorder %v55, 113
    %v340 = vsel %vm339, %v336, %v338
    %v341 = vsel %vm339, %v334, %v336
    %v342 = vsel %vm339, %v332, %v334
    %v343 = vsel %vm339, %v338, %v332
    %s344 = scalar_lea.vmem %s1, 6
    %v345 = vld [vmem:[%s344] ss:$8 sm:$0xf]
    %v347 = vperm.slane %v345, 0
    %v348 = vperm.slane %v345, 1
    %v349 = vperm.slane %v345, 2
    %v350 = vperm.slane %v345, 3
    %v355 = vmul.f32 %v342, %v347
    %v356 = vmul.f32 %v341, %v348
    %v357 = vmul.f32 %v340, %v349
    %v358 = vmul.f32 %v343, %v350
    %359 = vst [vmem:[#allocation2 + $0x60] sm:$0xf] %v355
    %360 = vst [vmem:[#allocation2 + $0x68] sm:$0xf] %v356
    %361 = vst [vmem:[#allocation2 + $0x70] sm:$0xf] %v357
    %362 = vst [vmem:[#allocation2 + $0x78] sm:$0xf] %v358
    %363 = vst [vmem:[#allocation1] ss:$2 sm:$0xff] %v31
    %s364 = scalar_lea.vmem [#allocation1], 16
    %365 = vst [vmem:[%s364] ss:$2 sm:$0xff] %v32
    %v366 = vld.sshfl [vmem:[#allocation1] sm:$0xff pattern:$0x75316420]
    %v367 = vld.sshfl [vmem:[#allocation1 + $0x8] sm:$0xff pattern:$0x75316420]
    %v368 = vld.sshfl [vmem:[#allocation1 + $0x10] sm:$0xff pattern:$0x75316420]
    %v369 = vld.sshfl [vmem:[#allocation1 + $0x18] sm:$0xff pattern:$0x75316420]
    %374 = vrot.lane.b32.xlu0 %v366, 112
    %v375 = vpop.permute.xlu0 %374
    %376 = vrot.lane.b32.xlu0 %v367, 112
    %v377 = vpop.permute.xlu0 %376
    %378 = vrot.lane.b32.xlu0 %v368, 112
    %v379 = vpop.permute.xlu0 %378
    %380 = vrot.lane.b32.xlu0 %v369, 112
    %v381 = vpop.permute.xlu0 %380
    %vm382 = vcmp.lt.s32.totalorder %v55, 112
    %v383 = vsel %vm382, %v379, %v381
    %v384 = vsel %vm382, %v377, %v379
    %v385 = vsel %vm382, %v375, %v377
    %v386 = vsel %vm382, %v381, %v375
    %s387 = scalar_lea.vmem %s1, 7
    %v388 = vld [vmem:[%s387] ss:$8 sm:$0xf]
    %v390 = vperm.slane %v388, 0
    %v391 = vperm.slane %v388, 1
    %v392 = vperm.slane %v388, 2
    %v393 = vperm.slane %v388, 3
    %v398 = vmul.f32 %v385, %v390
    %v399 = vmul.f32 %v384, %v391
    %v400 = vmul.f32 %v383, %v392
    %v401 = vmul.f32 %v386, %v393
    %v406 = vrot.slane %v398, 4
    %v407 = vrot.slane %v399, 4
    %v408 = vrot.slane %v400, 4
    %v409 = vrot.slane %v401, 4
    %414 = vst [vmem:[#allocation2 + $0x60] sm:$0xf0] %v406
    %415 = vst [vmem:[#allocation2 + $0x68] sm:$0xf0] %v407
    %416 = vst [vmem:[#allocation2 + $0x70] sm:$0xf0] %v408
    %417 = vst [vmem:[#allocation2 + $0x78] sm:$0xf0] %v409
    %418 = vst [vmem:[#allocation1] ss:$2 sm:$0xff] %v31
    %s419 = scalar_lea.vmem [#allocation1], 16
    %420 = vst [vmem:[%s419] ss:$2 sm:$0xff] %v32
    %v421 = vld.sshfl [vmem:[#allocation1] sm:$0xff pattern:$0x75316420]
    %v422 = vld.sshfl [vmem:[#allocation1 + $0x8] sm:$0xff pattern:$0x75316420]
    %v423 = vld.sshfl [vmem:[#allocation1 + $0x10] sm:$0xff pattern:$0x75316420]
    %v424 = vld.sshfl [vmem:[#allocation1 + $0x18] sm:$0xff pattern:$0x75316420]
    %429 = vrot.lane.b32.xlu0 %v421, 111
    %v430 = vpop.permute.xlu0 %429
    %431 = vrot.lane.b32.xlu0 %v422, 111
    %v432 = vpop.permute.xlu0 %431
    %433 = vrot.lane.b32.xlu0 %v423, 111
    %v434 = vpop.permute.xlu0 %433
    %435 = vrot.lane.b32.xlu0 %v424, 111
    %v436 = vpop.permute.xlu0 %435
    %vm437 = vcmp.lt.s32.totalorder %v55, 111
    %v438 = vsel %vm437, %v434, %v436
    %v439 = vsel %vm437, %v432, %v434
    %v440 = vsel %vm437, %v430, %v432
    %v441 = vsel %vm437, %v436, %v430
    %s442 = scalar_lea.vmem %s1, 32
    %v443 = vld [vmem:[%s442] ss:$8 sm:$0xf]
    %v445 = vperm.slane %v443, 0
    %v446 = vperm.slane %v443, 1
    %v447 = vperm.slane %v443, 2
    %v448 = vperm.slane %v443, 3
    %v453 = vmul.f32 %v440, %v445
    %v454 = vmul.f32 %v439, %v446
    %v455 = vmul.f32 %v438, %v447
    %v456 = vmul.f32 %v441, %v448
    %457 = vst [vmem:[#allocation2 + $0x80] sm:$0xf] %v453
    %458 = vst [vmem:[#allocation2 + $0x88] sm:$0xf] %v454
    %459 = vst [vmem:[#allocation2 + $0x90] sm:$0xf] %v455
    %460 = vst [vmem:[#allocation2 + $0x98] sm:$0xf] %v456
    %v461 = vld [vmem:[%s2] sm:$0xf]
    %v462 = vld [vmem:[%s2 + $0x4] sm:$0xf]
    %v463 = vld [vmem:[%s2 + $0x8] sm:$0xf]
    %v464 = vld [vmem:[%s2 + $0xc] sm:$0xf]
    %v465 = vld [vmem:[#allocation2] sm:$0xff]
    %v466 = vld [vmem:[#allocation2 + $0x8] sm:$0xff]
    %v467 = vld [vmem:[#allocation2 + $0x10] sm:$0xff]
    %v468 = vld [vmem:[#allocation2 + $0x18] sm:$0xff]
    %v469 = vld [vmem:[#allocation2 + $0x20] sm:$0xff]
    %v470 = vld [vmem:[#allocation2 + $0x28] sm:$0xff]
    %v471 = vld [vmem:[#allocation2 + $0x30] sm:$0xff]
    %v472 = vld [vmem:[#allocation2 + $0x38] sm:$0xff]
    %v473 = vld [vmem:[#allocation2 + $0x40] sm:$0xff]
    %v474 = vld [vmem:[#allocation2 + $0x48] sm:$0xff]
    %v475 = vld [vmem:[#allocation2 + $0x50] sm:$0xff]
    %v476 = vld [vmem:[#allocation2 + $0x58] sm:$0xff]
    %v477 = vld [vmem:[#allocation2 + $0x60] sm:$0xff]
    %v478 = vld [vmem:[#allocation2 + $0x68] sm:$0xff]
    %v479 = vld [vmem:[#allocation2 + $0x70] sm:$0xff]
    %v480 = vld [vmem:[#allocation2 + $0x78] sm:$0xff]
    %v481 = vld [vmem:[#allocation2 + $0x80] sm:$0xf]
    %v482 = vld [vmem:[#allocation2 + $0x88] sm:$0xf]
    %v483 = vld [vmem:[#allocation2 + $0x90] sm:$0xf]
    %v484 = vld [vmem:[#allocation2 + $0x98] sm:$0xf]
    %v485 = vpack.c.bf16 %v469, %v465
    %v486 = vpack.c.bf16 %v470, %v466
    %v487 = vpack.c.bf16 %v471, %v467
    %v488 = vpack.c.bf16 %v472, %v468
    %v489 = vpack.c.bf16 %v477, %v473
    %v490 = vpack.c.bf16 %v478, %v474
    %v491 = vpack.c.bf16 %v479, %v475
    %v492 = vpack.c.bf16 %v480, %v476
    %v493 = vpack.c.bf16 %v481, %v481
    %v494 = vpack.c.bf16 %v482, %v482
    %v495 = vpack.c.bf16 %v483, %v483
    %v496 = vpack.c.bf16 %v484, %v484
    %v497 = vld [vmem:[%s3] sm:$0xff]
    %v498 = vld [vmem:[%s3 + $0x8] sm:$0xff]
    %v499 = vld [vmem:[%s3 + $0x10] sm:$0xff]
    %v500 = vld [vmem:[%s3 + $0x18] sm:$0xff]
    %502 = vset.pattern.permute.xlu0 0
    %503 = vperm.xlu0 %502, %v497
    %v504 = vpop.permute.xlu0 %503
    %507 = vset.pattern.permute.xlu0 0
    %508 = vperm.xlu0 %507, %v498
    %v509 = vpop.permute.xlu0 %508
    %512 = vset.pattern.permute.xlu0 0
    %513 = vperm.xlu0 %512, %v499
    %v514 = vpop.permute.xlu0 %513
    %517 = vset.pattern.permute.xlu0 0
    %518 = vperm.xlu0 %517, %v500
    %v519 = vpop.permute.xlu0 %518
    %v525 = vunpack.c.l.b16 %v461
    %v526 = vunpack.c.l.b16 %v462
    %v527 = vunpack.c.l.b16 %v463
    %v528 = vunpack.c.l.b16 %v464
    %v529 = vpack.c.b16 %v526, %v525
    %v530 = vpack.c.b16 %v528, %v527
    %vm531 = vcmask 293888
    %v533 = vsel %vm531, %v529, 0
    %v536 = vsel %vm531, %v530, 0
    %vm538 = vcmask 1041408
    %v540 = vsel %vm538, %v493, 0
    %v543 = vsel %vm538, %v494, 0
    %v546 = vsel %vm538, %v495, 0
    %v549 = vsel %vm538, %v496, 0
    %551 = vmatpush.bf16.msra.mxu0 0
    %552 = vmatpush.bf16.msra.mxu0 0
    %553 = vmatpush.bf16.msra.mxu0 0
    %554 = vmatpush.bf16.msra.mxu0 0
    %555 = vmatpush.bf16.msra.mxu0 0
    %556 = vmatpush.bf16.msra.mxu0 %v540
    %557 = vmatpush.bf16.msra.mxu0 %v489
    %558 = vmatpush.bf16.msra.mxu0 %v485
    %559 = vmatmul.bf16.gmra.mxu0 %v533
    %v560 = vpop.f32.mrf.mxu0
    %v561 = vadd.f32 %v504, %v560
    %v562 = vpop.f32.mrf.mxu0
    %v563 = vadd.f32 %v509, %v562
    %564 = vmatmul.bf16.gmra.mxu0 %v536
    %v565 = vpop.f32.mrf.mxu0
    %v566 = vadd.f32 %v514, %v565
    %v567 = vpop.f32.mrf.mxu0
    %v568 = vadd.f32 %v519, %v567
    %569 = vdwg.mxu0
    %570 = vmatpush.bf16.msra.mxu0 0
    %571 = vmatpush.bf16.msra.mxu0 0
    %572 = vmatpush.bf16.msra.mxu0 0
    %573 = vmatpush.bf16.msra.mxu0 0
    %574 = vmatpush.bf16.msra.mxu0 0
    %575 = vmatpush.bf16.msra.mxu0 %v543
    %576 = vmatpush.bf16.msra.mxu0 %v490
    %577 = vmatpush.bf16.msra.mxu0 %v486
    %578 = vmatmul.bf16.gmra.mxu0 %v533
    %v579 = vpop.f32.mrf.mxu0
    %v580 = vadd.f32 %v504, %v579
    %v581 = vpop.f32.mrf.mxu0
    %v582 = vadd.f32 %v509, %v581
    %583 = vmatmul.bf16.gmra.mxu0 %v536
    %v584 = vpop.f32.mrf.mxu0
    %v585 = vadd.f32 %v514, %v584
    %v586 = vpop.f32.mrf.mxu0
    %v587 = vadd.f32 %v519, %v586
    %588 = vdwg.mxu0
    %589 = vmatpush.bf16.msra.mxu0 0
    %590 = vmatpush.bf16.msra.mxu0 0
    %591 = vmatpush.bf16.msra.mxu0 0
    %592 = vmatpush.bf16.msra.mxu0 0
    %593 = vmatpush.bf16.msra.mxu0 0
    %594 = vmatpush.bf16.msra.mxu0 %v546
    %595 = vmatpush.bf16.msra.mxu0 %v491
    %596 = vmatpush.bf16.msra.mxu0 %v487
    %597 = vmatmul.bf16.gmra.mxu0 %v533
    %v598 = vpop.f32.mrf.mxu0
    %v599 = vadd.f32 %v504, %v598
    %v600 = vpop.f32.mrf.mxu0
    %v601 = vadd.f32 %v509, %v600
    %602 = vmatmul.bf16.gmra.mxu0 %v536
    %v603 = vpop.f32.mrf.mxu0
    %v604 = vadd.f32 %v514, %v603
    %v605 = vpop.f32.mrf.mxu0
    %v606 = vadd.f32 %v519, %v605
    %607 = vdwg.mxu0
    %608 = vmatpush.bf16.msra.mxu0 0
    %609 = vmatpush.bf16.msra.mxu0 0
    %610 = vmatpush.bf16.msra.mxu0 0
    %611 = vmatpush.bf16.msra.mxu0 0
    %612 = vmatpush.bf16.msra.mxu0 0
    %613 = vmatpush.bf16.msra.mxu0 %v549
    %614 = vmatpush.bf16.msra.mxu0 %v492
    %615 = vmatpush.bf16.msra.mxu0 %v488
    %616 = vmatmul.bf16.gmra.mxu0 %v533
    %v617 = vpop.f32.mrf.mxu0
    %v618 = vadd.f32 %v504, %v617
    %v619 = vpop.f32.mrf.mxu0
    %v620 = vadd.f32 %v509, %v619
    %621 = vmatmul.bf16.gmra.mxu0 %v536
    %v622 = vpop.f32.mrf.mxu0
    %v623 = vadd.f32 %v514, %v622
    %v624 = vpop.f32.mrf.mxu0
    %v625 = vadd.f32 %v519, %v624
    %626 = vdwg.mxu0
    %v627 = vmax.f32 %v561, 0.0
    %v628 = vmax.f32 %v580, 0.0
    %v629 = vmax.f32 %v599, 0.0
    %v630 = vmax.f32 %v618, 0.0
    %v631 = vmax.f32 %v563, 0.0
    %v632 = vmax.f32 %v582, 0.0
    %v633 = vmax.f32 %v601, 0.0
    %v634 = vmax.f32 %v620, 0.0
    %v635 = vmax.f32 %v566, 0.0
    %v636 = vmax.f32 %v585, 0.0
    %v637 = vmax.f32 %v604, 0.0
    %v638 = vmax.f32 %v623, 0.0
    %v639 = vmax.f32 %v568, 0.0
    %v640 = vmax.f32 %v587, 0.0
    %v641 = vmax.f32 %v606, 0.0
    %v642 = vmax.f32 %v625, 0.0
    %643 = vrot.lane.b32.xlu0 %v627, 17
    %v644 = vpop.permute.xlu0 %643
    %645 = vrot.lane.b32.xlu0 %v631, 17
    %v646 = vpop.permute.xlu0 %645
    %647 = vrot.lane.b32.xlu0 %v635, 17
    %v648 = vpop.permute.xlu0 %647
    %649 = vrot.lane.b32.xlu0 %v639, 17
    %v650 = vpop.permute.xlu0 %649
    %651 = vrot.lane.b32.xlu0 %v628, 17
    %v652 = vpop.permute.xlu0 %651
    %653 = vrot.lane.b32.xlu0 %v632, 17
    %v654 = vpop.permute.xlu0 %653
    %655 = vrot.lane.b32.xlu0 %v636, 17
    %v656 = vpop.permute.xlu0 %655
    %657 = vrot.lane.b32.xlu0 %v640, 17
    %v658 = vpop.permute.xlu0 %657
    %659 = vrot.lane.b32.xlu0 %v629, 17
    %v660 = vpop.permute.xlu0 %659
    %661 = vrot.lane.b32.xlu0 %v633, 17
    %v662 = vpop.permute.xlu0 %661
    %663 = vrot.lane.b32.xlu0 %v637, 17
    %v664 = vpop.permute.xlu0 %663
    %665 = vrot.lane.b32.xlu0 %v641, 17
    %v666 = vpop.permute.xlu0 %665
    %667 = vrot.lane.b32.xlu0 %v630, 17
    %v668 = vpop.permute.xlu0 %667
    %669 = vrot.lane.b32.xlu0 %v634, 17
    %v670 = vpop.permute.xlu0 %669
    %671 = vrot.lane.b32.xlu0 %v638, 17
    %v672 = vpop.permute.xlu0 %671
    %673 = vrot.lane.b32.xlu0 %v642, 17
    %v674 = vpop.permute.xlu0 %673
    %v675 = vsel %vm56, %v660, %v668
    %v676 = vsel %vm56, %v662, %v670
    %v677 = vsel %vm56, %v664, %v672
    %v678 = vsel %vm56, %v666, %v674
    %v679 = vsel %vm56, %v652, %v660
    %v680 = vsel %vm56, %v654, %v662
    %v681 = vsel %vm56, %v656, %v664
    %v682 = vsel %vm56, %v658, %v666
    %v683 = vsel %vm56, %v644, %v652
    %v684 = vsel %vm56, %v646, %v654
    %v685 = vsel %vm56, %v648, %v656
    %v686 = vsel %vm56, %v650, %v658
    %v687 = vsel %vm56, %v668, %v644
    %v688 = vsel %vm56, %v670, %v646
    %v689 = vsel %vm56, %v672, %v648
    %v690 = vsel %vm56, %v674, %v650
    %v691 = vld [vmem:[%s1] ss:$8 sm:$0xf]
    %v693 = vperm.slane %v691, 0
    %v694 = vperm.slane %v691, 1
    %v695 = vperm.slane %v691, 2
    %v696 = vperm.slane %v691, 3
    %v701 = vmul.f32 %v687, %v693
    %v702 = vmul.f32 %v683, %v694
    %v703 = vmul.f32 %v679, %v695
    %v704 = vmul.f32 %v675, %v696
    %v705 = vmul.f32 %v688, %v693
    %v706 = vmul.f32 %v684, %v694
    %v707 = vmul.f32 %v680, %v695
    %v708 = vmul.f32 %v676, %v696
    %v709 = vmul.f32 %v689, %v693
    %v710 = vmul.f32 %v685, %v694
    %v711 = vmul.f32 %v681, %v695
    %v712 = vmul.f32 %v677, %v696
    %v713 = vmul.f32 %v690, %v693
    %v714 = vmul.f32 %v686, %v694
    %v715 = vmul.f32 %v682, %v695
    %v716 = vmul.f32 %v678, %v696
    %v717 = vpack.c.bf16 %v702, %v701
    %v718 = vpack.c.bf16 %v704, %v703
    %v719 = vpack.c.bf16 %v706, %v705
    %v720 = vpack.c.bf16 %v708, %v707
    %v721 = vpack.c.bf16 %v710, %v709
    %v722 = vpack.c.bf16 %v712, %v711
    %v723 = vpack.c.bf16 %v714, %v713
    %v724 = vpack.c.bf16 %v716, %v715
    %725 = vst [vmem:[#allocation3] sm:$0xff] %v717
    %726 = vst [vmem:[#allocation3 + $0x8] sm:$0xff] %v718
    %727 = vst [vmem:[#allocation3 + $0x10] sm:$0xff] %v719
    %728 = vst [vmem:[#allocation3 + $0x18] sm:$0xff] %v720
    %729 = vst [vmem:[#allocation3 + $0x20] sm:$0xff] %v721
    %730 = vst [vmem:[#allocation3 + $0x28] sm:$0xff] %v722
    %731 = vst [vmem:[#allocation3 + $0x30] sm:$0xff] %v723
    %732 = vst [vmem:[#allocation3 + $0x38] sm:$0xff] %v724
    %733 = vrot.lane.b32.xlu0 %v627, 16
    %v734 = vpop.permute.xlu0 %733
    %735 = vrot.lane.b32.xlu0 %v631, 16
    %v736 = vpop.permute.xlu0 %735
    %737 = vrot.lane.b32.xlu0 %v635, 16
    %v738 = vpop.permute.xlu0 %737
    %739 = vrot.lane.b32.xlu0 %v639, 16
    %v740 = vpop.permute.xlu0 %739
    %741 = vrot.lane.b32.xlu0 %v628, 16
    %v742 = vpop.permute.xlu0 %741
    %743 = vrot.lane.b32.xlu0 %v632, 16
    %v744 = vpop.permute.xlu0 %743
    %745 = vrot.lane.b32.xlu0 %v636, 16
    %v746 = vpop.permute.xlu0 %745
    %747 = vrot.lane.b32.xlu0 %v640, 16
    %v748 = vpop.permute.xlu0 %747
    %749 = vrot.lane.b32.xlu0 %v629, 16
    %v750 = vpop.permute.xlu0 %749
    %751 = vrot.lane.b32.xlu0 %v633, 16
    %v752 = vpop.permute.xlu0 %751
    %753 = vrot.lane.b32.xlu0 %v637, 16
    %v754 = vpop.permute.xlu0 %753
    %755 = vrot.lane.b32.xlu0 %v641, 16
    %v756 = vpop.permute.xlu0 %755
    %757 = vrot.lane.b32.xlu0 %v630, 16
    %v758 = vpop.permute.xlu0 %757
    %759 = vrot.lane.b32.xlu0 %v634, 16
    %v760 = vpop.permute.xlu0 %759
    %761 = vrot.lane.b32.xlu0 %v638, 16
    %v762 = vpop.permute.xlu0 %761
    %763 = vrot.lane.b32.xlu0 %v642, 16
    %v764 = vpop.permute.xlu0 %763
    %v765 = vsel %vm98, %v750, %v758
    %v766 = vsel %vm98, %v752, %v760
    %v767 = vsel %vm98, %v754, %v762
    %v768 = vsel %vm98, %v756, %v764
    %v769 = vsel %vm98, %v742, %v750
    %v770 = vsel %vm98, %v744, %v752
    %v771 = vsel %vm98, %v746, %v754
    %v772 = vsel %vm98, %v748, %v756
    %v773 = vsel %vm98, %v734, %v742
    %v774 = vsel %vm98, %v736, %v744
    %v775 = vsel %vm98, %v738, %v746
    %v776 = vsel %vm98, %v740, %v748
    %v777 = vsel %vm98, %v758, %v734
    %v778 = vsel %vm98, %v760, %v736
    %v779 = vsel %vm98, %v762, %v738
    %v780 = vsel %vm98, %v764, %v740
    %v781 = vld [vmem:[%s103] ss:$8 sm:$0xf]
    %v783 = vperm.slane %v781, 0
    %v784 = vperm.slane %v781, 1
    %v785 = vperm.slane %v781, 2
    %v786 = vperm.slane %v781, 3
    %v791 = vmul.f32 %v777, %v783
    %v792 = vmul.f32 %v773, %v784
    %v793 = vmul.f32 %v769, %v785
    %v794 = vmul.f32 %v765, %v786
    %v795 = vmul.f32 %v778, %v783
    %v796 = vmul.f32 %v774, %v784
    %v797 = vmul.f32 %v770, %v785
    %v798 = vmul.f32 %v766, %v786
    %v799 = vmul.f32 %v779, %v783
    %v800 = vmul.f32 %v775, %v784
    %v801 = vmul.f32 %v771, %v785
    %v802 = vmul.f32 %v767, %v786
    %v803 = vmul.f32 %v780, %v783
    %v804 = vmul.f32 %v776, %v784
    %v805 = vmul.f32 %v772, %v785
    %v806 = vmul.f32 %v768, %v786
    %v807 = vpack.c.bf16 %v792, %v791
    %v808 = vpack.c.bf16 %v794, %v793
    %v809 = vpack.c.bf16 %v796, %v795
    %v810 = vpack.c.bf16 %v798, %v797
    %v811 = vpack.c.bf16 %v800, %v799
    %v812 = vpack.c.bf16 %v802, %v801
    %v813 = vpack.c.bf16 %v804, %v803
    %v814 = vpack.c.bf16 %v806, %v805
    %815 = vst [vmem:[#allocation3 + $0x40] sm:$0xff] %v807
    %816 = vst [vmem:[#allocation3 + $0x48] sm:$0xff] %v808
    %817 = vst [vmem:[#allocation3 + $0x50] sm:$0xff] %v809
    %818 = vst [vmem:[#allocation3 + $0x58] sm:$0xff] %v810
    %819 = vst [vmem:[#allocation3 + $0x60] sm:$0xff] %v811
    %820 = vst [vmem:[#allocation3 + $0x68] sm:$0xff] %v812
    %821 = vst [vmem:[#allocation3 + $0x70] sm:$0xff] %v813
    %822 = vst [vmem:[#allocation3 + $0x78] sm:$0xff] %v814
    %823 = vrot.lane.b32.xlu0 %v627, 15
    %v824 = vpop.permute.xlu0 %823
    %825 = vrot.lane.b32.xlu0 %v631, 15
    %v826 = vpop.permute.xlu0 %825
    %827 = vrot.lane.b32.xlu0 %v635, 15
    %v828 = vpop.permute.xlu0 %827
    %829 = vrot.lane.b32.xlu0 %v639, 15
    %v830 = vpop.permute.xlu0 %829
    %831 = vrot.lane.b32.xlu0 %v628, 15
    %v832 = vpop.permute.xlu0 %831
    %833 = vrot.lane.b32.xlu0 %v632, 15
    %v834 = vpop.permute.xlu0 %833
    %835 = vrot.lane.b32.xlu0 %v636, 15
    %v836 = vpop.permute.xlu0 %835
    %837 = vrot.lane.b32.xlu0 %v640, 15
    %v838 = vpop.permute.xlu0 %837
    %839 = vrot.lane.b32.xlu0 %v629, 15
    %v840 = vpop.permute.xlu0 %839
    %841 = vrot.lane.b32.xlu0 %v633, 15
    %v842 = vpop.permute.xlu0 %841
    %843 = vrot.lane.b32.xlu0 %v637, 15
    %v844 = vpop.permute.xlu0 %843
    %845 = vrot.lane.b32.xlu0 %v641, 15
    %v846 = vpop.permute.xlu0 %845
    %847 = vrot.lane.b32.xlu0 %v630, 15
    %v848 = vpop.permute.xlu0 %847
    %849 = vrot.lane.b32.xlu0 %v634, 15
    %v850 = vpop.permute.xlu0 %849
    %851 = vrot.lane.b32.xlu0 %v638, 15
    %v852 = vpop.permute.xlu0 %851
    %853 = vrot.lane.b32.xlu0 %v642, 15
    %v854 = vpop.permute.xlu0 %853
    %v855 = vsel %vm153, %v840, %v848
    %v856 = vsel %vm153, %v842, %v850
    %v857 = vsel %vm153, %v844, %v852
    %v858 = vsel %vm153, %v846, %v854
    %v859 = vsel %vm153, %v832, %v840
    %v860 = vsel %vm153, %v834, %v842
    %v861 = vsel %vm153, %v836, %v844
    %v862 = vsel %vm153, %v838, %v846
    %v863 = vsel %vm153, %v824, %v832
    %v864 = vsel %vm153, %v826, %v834
    %v865 = vsel %vm153, %v828, %v836
    %v866 = vsel %vm153, %v830, %v838
    %v867 = vsel %vm153, %v848, %v824
    %v868 = vsel %vm153, %v850, %v826
    %v869 = vsel %vm153, %v852, %v828
    %v870 = vsel %vm153, %v854, %v830
    %v871 = vld [vmem:[%s158] ss:$8 sm:$0xf]
    %v873 = vperm.slane %v871, 0
    %v874 = vperm.slane %v871, 1
    %v875 = vperm.slane %v871, 2
    %v876 = vperm.slane %v871, 3
    %v881 = vmul.f32 %v867, %v873
    %v882 = vmul.f32 %v863, %v874
    %v883 = vmul.f32 %v859, %v875
    %v884 = vmul.f32 %v855, %v876
    %v885 = vmul.f32 %v868, %v873
    %v886 = vmul.f32 %v864, %v874
    %v887 = vmul.f32 %v860, %v875
    %v888 = vmul.f32 %v856, %v876
    %v889 = vmul.f32 %v869, %v873
    %v890 = vmul.f32 %v865, %v874
    %v891 = vmul.f32 %v861, %v875
    %v892 = vmul.f32 %v857, %v876
    %v893 = vmul.f32 %v870, %v873
    %v894 = vmul.f32 %v866, %v874
    %v895 = vmul.f32 %v862, %v875
    %v896 = vmul.f32 %v858, %v876
    %v897 = vpack.c.bf16 %v882, %v881
    %v898 = vpack.c.bf16 %v884, %v883
    %v899 = vpack.c.bf16 %v886, %v885
    %v900 = vpack.c.bf16 %v888, %v887
    %v901 = vpack.c.bf16 %v890, %v889
    %v902 = vpack.c.bf16 %v892, %v891
    %v903 = vpack.c.bf16 %v894, %v893
    %v904 = vpack.c.bf16 %v896, %v895
    %905 = vst [vmem:[#allocation3 + $0x80] sm:$0xff] %v897
    %906 = vst [vmem:[#allocation3 + $0x88] sm:$0xff] %v898
    %907 = vst [vmem:[#allocation3 + $0x90] sm:$0xff] %v899
    %908 = vst [vmem:[#allocation3 + $0x98] sm:$0xff] %v900
    %909 = vst [vmem:[#allocation3 + $0xa0] sm:$0xff] %v901
    %910 = vst [vmem:[#allocation3 + $0xa8] sm:$0xff] %v902
    %911 = vst [vmem:[#allocation3 + $0xb0] sm:$0xff] %v903
    %912 = vst [vmem:[#allocation3 + $0xb8] sm:$0xff] %v904
    %913 = vrot.lane.b32.xlu0 %v627, 1
    %v914 = vpop.permute.xlu0 %913
    %915 = vrot.lane.b32.xlu0 %v631, 1
    %v916 = vpop.permute.xlu0 %915
    %917 = vrot.lane.b32.xlu0 %v635, 1
    %v918 = vpop.permute.xlu0 %917
    %919 = vrot.lane.b32.xlu0 %v639, 1
    %v920 = vpop.permute.xlu0 %919
    %921 = vrot.lane.b32.xlu0 %v628, 1
    %v922 = vpop.permute.xlu0 %921
    %923 = vrot.lane.b32.xlu0 %v632, 1
    %v924 = vpop.permute.xlu0 %923
    %925 = vrot.lane.b32.xlu0 %v636, 1
    %v926 = vpop.permute.xlu0 %925
    %927 = vrot.lane.b32.xlu0 %v640, 1
    %v928 = vpop.permute.xlu0 %927
    %929 = vrot.lane.b32.xlu0 %v629, 1
    %v930 = vpop.permute.xlu0 %929
    %931 = vrot.lane.b32.xlu0 %v633, 1
    %v932 = vpop.permute.xlu0 %931
    %933 = vrot.lane.b32.xlu0 %v637, 1
    %v934 = vpop.permute.xlu0 %933
    %935 = vrot.lane.b32.xlu0 %v641, 1
    %v936 = vpop.permute.xlu0 %935
    %937 = vrot.lane.b32.xlu0 %v630, 1
    %v938 = vpop.permute.xlu0 %937
    %939 = vrot.lane.b32.xlu0 %v634, 1
    %v940 = vpop.permute.xlu0 %939
    %941 = vrot.lane.b32.xlu0 %v638, 1
    %v942 = vpop.permute.xlu0 %941
    %943 = vrot.lane.b32.xlu0 %v642, 1
    %v944 = vpop.permute.xlu0 %943
    %v945 = vsel %vm196, %v930, %v938
    %v946 = vsel %vm196, %v932, %v940
    %v947 = vsel %vm196, %v934, %v942
    %v948 = vsel %vm196, %v936, %v944
    %v949 = vsel %vm196, %v922, %v930
    %v950 = vsel %vm196, %v924, %v932
    %v951 = vsel %vm196, %v926, %v934
    %v952 = vsel %vm196, %v928, %v936
    %v953 = vsel %vm196, %v914, %v922
    %v954 = vsel %vm196, %v916, %v924
    %v955 = vsel %vm196, %v918, %v926
    %v956 = vsel %vm196, %v920, %v928
    %v957 = vsel %vm196, %v938, %v914
    %v958 = vsel %vm196, %v940, %v916
    %v959 = vsel %vm196, %v942, %v918
    %v960 = vsel %vm196, %v944, %v920
    %v961 = vld [vmem:[%s201] ss:$8 sm:$0xf]
    %v963 = vperm.slane %v961, 0
    %v964 = vperm.slane %v961, 1
    %v965 = vperm.slane %v961, 2
    %v966 = vperm.slane %v961, 3
    %v971 = vmul.f32 %v957, %v963
    %v972 = vmul.f32 %v953, %v964
    %v973 = vmul.f32 %v949, %v965
    %v974 = vmul.f32 %v945, %v966
    %v975 = vmul.f32 %v958, %v963
    %v976 = vmul.f32 %v954, %v964
    %v977 = vmul.f32 %v950, %v965
    %v978 = vmul.f32 %v946, %v966
    %v979 = vmul.f32 %v959, %v963
    %v980 = vmul.f32 %v955, %v964
    %v981 = vmul.f32 %v951, %v965
    %v982 = vmul.f32 %v947, %v966
    %v983 = vmul.f32 %v960, %v963
    %v984 = vmul.f32 %v956, %v964
    %v985 = vmul.f32 %v952, %v965
    %v986 = vmul.f32 %v948, %v966
    %v987 = vpack.c.bf16 %v972, %v971
    %v988 = vpack.c.bf16 %v974, %v973
    %v989 = vpack.c.bf16 %v976, %v975
    %v990 = vpack.c.bf16 %v978, %v977
    %v991 = vpack.c.bf16 %v980, %v979
    %v992 = vpack.c.bf16 %v982, %v981
    %v993 = vpack.c.bf16 %v984, %v983
    %v994 = vpack.c.bf16 %v986, %v985
    %995 = vst [vmem:[#allocation3 + $0xc0] sm:$0xff] %v987
    %996 = vst [vmem:[#allocation3 + $0xc8] sm:$0xff] %v988
    %997 = vst [vmem:[#allocation3 + $0xd0] sm:$0xff] %v989
    %998 = vst [vmem:[#allocation3 + $0xd8] sm:$0xff] %v990
    %999 = vst [vmem:[#allocation3 + $0xe0] sm:$0xff] %v991
    %1000 = vst [vmem:[#allocation3 + $0xe8] sm:$0xff] %v992
    %1001 = vst [vmem:[#allocation3 + $0xf0] sm:$0xff] %v993
    %1002 = vst [vmem:[#allocation3 + $0xf8] sm:$0xff] %v994
    %v1003 = vld [vmem:[%s232] ss:$8 sm:$0xf]
    %v1005 = vperm.slane %v1003, 0
    %v1006 = vperm.slane %v1003, 1
    %v1007 = vperm.slane %v1003, 2
    %v1008 = vperm.slane %v1003, 3
    %v1013 = vmul.f32 %v627, %v1005
    %v1014 = vmul.f32 %v628, %v1006
    %v1015 = vmul.f32 %v629, %v1007
    %v1016 = vmul.f32 %v630, %v1008
    %v1017 = vmul.f32 %v631, %v1005
    %v1018 = vmul.f32 %v632, %v1006
    %v1019 = vmul.f32 %v633, %v1007
    %v1020 = vmul.f32 %v634, %v1008
    %v1021 = vmul.f32 %v635, %v1005
    %v1022 = vmul.f32 %v636, %v1006
    %v1023 = vmul.f32 %v637, %v1007
    %v1024 = vmul.f32 %v638, %v1008
    %v1025 = vmul.f32 %v639, %v1005
    %v1026 = vmul.f32 %v640, %v1006
    %v1027 = vmul.f32 %v641, %v1007
    %v1028 = vmul.f32 %v642, %v1008
    %v1029 = vpack.c.bf16 %v1014, %v1013
    %v1030 = vpack.c.bf16 %v1016, %v1015
    %v1031 = vpack.c.bf16 %v1018, %v1017
    %v1032 = vpack.c.bf16 %v1020, %v1019
    %v1033 = vpack.c.bf16 %v1022, %v1021
    %v1034 = vpack.c.bf16 %v1024, %v1023
    %v1035 = vpack.c.bf16 %v1026, %v1025
    %v1036 = vpack.c.bf16 %v1028, %v1027
    %1037 = vst [vmem:[#allocation3 + $0x100] sm:$0xff] %v1029
    %1038 = vst [vmem:[#allocation3 + $0x108] sm:$0xff] %v1030
    %1039 = vst [vmem:[#allocation3 + $0x110] sm:$0xff] %v1031
    %1040 = vst [vmem:[#allocation3 + $0x118] sm:$0xff] %v1032
    %1041 = vst [vmem:[#allocation3 + $0x120] sm:$0xff] %v1033
    %1042 = vst [vmem:[#allocation3 + $0x128] sm:$0xff] %v1034
    %1043 = vst [vmem:[#allocation3 + $0x130] sm:$0xff] %v1035
    %1044 = vst [vmem:[#allocation3 + $0x138] sm:$0xff] %v1036
    %1045 = vrot.lane.b32.xlu0 %v627, 127
    %v1046 = vpop.permute.xlu0 %1045
    %1047 = vrot.lane.b32.xlu0 %v631, 127
    %v1048 = vpop.permute.xlu0 %1047
    %1049 = vrot.lane.b32.xlu0 %v635, 127
    %v1050 = vpop.permute.xlu0 %1049
    %1051 = vrot.lane.b32.xlu0 %v639, 127
    %v1052 = vpop.permute.xlu0 %1051
    %1053 = vrot.lane.b32.xlu0 %v628, 127
    %v1054 = vpop.permute.xlu0 %1053
    %1055 = vrot.lane.b32.xlu0 %v632, 127
    %v1056 = vpop.permute.xlu0 %1055
    %1057 = vrot.lane.b32.xlu0 %v636, 127
    %v1058 = vpop.permute.xlu0 %1057
    %1059 = vrot.lane.b32.xlu0 %v640, 127
    %v1060 = vpop.permute.xlu0 %1059
    %1061 = vrot.lane.b32.xlu0 %v629, 127
    %v1062 = vpop.permute.xlu0 %1061
    %1063 = vrot.lane.b32.xlu0 %v633, 127
    %v1064 = vpop.permute.xlu0 %1063
    %1065 = vrot.lane.b32.xlu0 %v637, 127
    %v1066 = vpop.permute.xlu0 %1065
    %1067 = vrot.lane.b32.xlu0 %v641, 127
    %v1068 = vpop.permute.xlu0 %1067
    %1069 = vrot.lane.b32.xlu0 %v630, 127
    %v1070 = vpop.permute.xlu0 %1069
    %1071 = vrot.lane.b32.xlu0 %v634, 127
    %v1072 = vpop.permute.xlu0 %1071
    %1073 = vrot.lane.b32.xlu0 %v638, 127
    %v1074 = vpop.permute.xlu0 %1073
    %1075 = vrot.lane.b32.xlu0 %v642, 127
    %v1076 = vpop.permute.xlu0 %1075
    %v1077 = vsel %vm284, %v1062, %v1070
    %v1078 = vsel %vm284, %v1064, %v1072
    %v1079 = vsel %vm284, %v1066, %v1074
    %v1080 = vsel %vm284, %v1068, %v1076
    %v1081 = vsel %vm284, %v1054, %v1062
    %v1082 = vsel %vm284, %v1056, %v1064
    %v1083 = vsel %vm284, %v1058, %v1066
    %v1084 = vsel %vm284, %v1060, %v1068
    %v1085 = vsel %vm284, %v1046, %v1054
    %v1086 = vsel %vm284, %v1048, %v1056
    %v1087 = vsel %vm284, %v1050, %v1058
    %v1088 = vsel %vm284, %v1052, %v1060
    %v1089 = vsel %vm284, %v1070, %v1046
    %v1090 = vsel %vm284, %v1072, %v1048
    %v1091 = vsel %vm284, %v1074, %v1050
    %v1092 = vsel %vm284, %v1076, %v1052
    %v1093 = vld [vmem:[%s289] ss:$8 sm:$0xf]
    %v1095 = vperm.slane %v1093, 0
    %v1096 = vperm.slane %v1093, 1
    %v1097 = vperm.slane %v1093, 2
    %v1098 = vperm.slane %v1093, 3
    %v1103 = vmul.f32 %v1085, %v1095
    %v1104 = vmul.f32 %v1081, %v1096
    %v1105 = vmul.f32 %v1077, %v1097
    %v1106 = vmul.f32 %v1089, %v1098
    %v1107 = vmul.f32 %v1086, %v1095
    %v1108 = vmul.f32 %v1082, %v1096
    %v1109 = vmul.f32 %v1078, %v1097
    %v1110 = vmul.f32 %v1090, %v1098
    %v1111 = vmul.f32 %v1087, %v1095
    %v1112 = vmul.f32 %v1083, %v1096
    %v1113 = vmul.f32 %v1079, %v1097
    %v1114 = vmul.f32 %v1091, %v1098
    %v1115 = vmul.f32 %v1088, %v1095
    %v1116 = vmul.f32 %v1084, %v1096
    %v1117 = vmul.f32 %v1080, %v1097
    %v1118 = vmul.f32 %v1092, %v1098
    %v1119 = vpack.c.bf16 %v1104, %v1103
    %v1120 = vpack.c.bf16 %v1106, %v1105
    %v1121 = vpack.c.bf16 %v1108, %v1107
    %v1122 = vpack.c.bf16 %v1110, %v1109
    %v1123 = vpack.c.bf16 %v1112, %v1111
    %v1124 = vpack.c.bf16 %v1114, %v1113
    %v1125 = vpack.c.bf16 %v1116, %v1115
    %v1126 = vpack.c.bf16 %v1118, %v1117
    %1127 = vst [vmem:[#allocation3 + $0x140] sm:$0xff] %v1119
    %1128 = vst [vmem:[#allocation3 + $0x148] sm:$0xff] %v1120
    %1129 = vst [vmem:[#allocation3 + $0x150] sm:$0xff] %v1121
    %1130 = vst [vmem:[#allocation3 + $0x158] sm:$0xff] %v1122
    %1131 = vst [vmem:[#allocation3 + $0x160] sm:$0xff] %v1123
    %1132 = vst [vmem:[#allocation3 + $0x168] sm:$0xff] %v1124
    %1133 = vst [vmem:[#allocation3 + $0x170] sm:$0xff] %v1125
    %1134 = vst [vmem:[#allocation3 + $0x178] sm:$0xff] %v1126
    %1135 = vrot.lane.b32.xlu0 %v627, 113
    %v1136 = vpop.permute.xlu0 %1135
    %1137 = vrot.lane.b32.xlu0 %v631, 113
    %v1138 = vpop.permute.xlu0 %1137
    %1139 = vrot.lane.b32.xlu0 %v635, 113
    %v1140 = vpop.permute.xlu0 %1139
    %1141 = vrot.lane.b32.xlu0 %v639, 113
    %v1142 = vpop.permute.xlu0 %1141
    %1143 = vrot.lane.b32.xlu0 %v628, 113
    %v1144 = vpop.permute.xlu0 %1143
    %1145 = vrot.lane.b32.xlu0 %v632, 113
    %v1146 = vpop.permute.xlu0 %1145
    %1147 = vrot.lane.b32.xlu0 %v636, 113
    %v1148 = vpop.permute.xlu0 %1147
    %1149 = vrot.lane.b32.xlu0 %v640, 113
    %v1150 = vpop.permute.xlu0 %1149
    %1151 = vrot.lane.b32.xlu0 %v629, 113
    %v1152 = vpop.permute.xlu0 %1151
    %1153 = vrot.lane.b32.xlu0 %v633, 113
    %v1154 = vpop.permute.xlu0 %1153
    %1155 = vrot.lane.b32.xlu0 %v637, 113
    %v1156 = vpop.permute.xlu0 %1155
    %1157 = vrot.lane.b32.xlu0 %v641, 113
    %v1158 = vpop.permute.xlu0 %1157
    %1159 = vrot.lane.b32.xlu0 %v630, 113
    %v1160 = vpop.permute.xlu0 %1159
    %1161 = vrot.lane.b32.xlu0 %v634, 113
    %v1162 = vpop.permute.xlu0 %1161
    %1163 = vrot.lane.b32.xlu0 %v638, 113
    %v1164 = vpop.permute.xlu0 %1163
    %1165 = vrot.lane.b32.xlu0 %v642, 113
    %v1166 = vpop.permute.xlu0 %1165
    %v1167 = vsel %vm339, %v1152, %v1160
    %v1168 = vsel %vm339, %v1154, %v1162
    %v1169 = vsel %vm339, %v1156, %v1164
    %v1170 = vsel %vm339, %v1158, %v1166
    %v1171 = vsel %vm339, %v1144, %v1152
    %v1172 = vsel %vm339, %v1146, %v1154
    %v1173 = vsel %vm339, %v1148, %v1156
    %v1174 = vsel %vm339, %v1150, %v1158
    %v1175 = vsel %vm339, %v1136, %v1144
    %v1176 = vsel %vm339, %v1138, %v1146
    %v1177 = vsel %vm339, %v1140, %v1148
    %v1178 = vsel %vm339, %v1142, %v1150
    %v1179 = vsel %vm339, %v1160, %v1136
    %v1180 = vsel %vm339, %v1162, %v1138
    %v1181 = vsel %vm339, %v1164, %v1140
    %v1182 = vsel %vm339, %v1166, %v1142
    %v1183 = vld [vmem:[%s344] ss:$8 sm:$0xf]
    %v1185 = vperm.slane %v1183, 0
    %v1186 = vperm.slane %v1183, 1
    %v1187 = vperm.slane %v1183, 2
    %v1188 = vperm.slane %v1183, 3
    %v1193 = vmul.f32 %v1175, %v1185
    %v1194 = vmul.f32 %v1171, %v1186
    %v1195 = vmul.f32 %v1167, %v1187
    %v1196 = vmul.f32 %v1179, %v1188
    %v1197 = vmul.f32 %v1176, %v1185
    %v1198 = vmul.f32 %v1172, %v1186
    %v1199 = vmul.f32 %v1168, %v1187
    %v1200 = vmul.f32 %v1180, %v1188
    %v1201 = vmul.f32 %v1177, %v1185
    %v1202 = vmul.f32 %v1173, %v1186
    %v1203 = vmul.f32 %v1169, %v1187
    %v1204 = vmul.f32 %v1181, %v1188
    %v1205 = vmul.f32 %v1178, %v1185
    %v1206 = vmul.f32 %v1174, %v1186
    %v1207 = vmul.f32 %v1170, %v1187
    %v1208 = vmul.f32 %v1182, %v1188
    %v1209 = vpack.c.bf16 %v1194, %v1193
    %v1210 = vpack.c.bf16 %v1196, %v1195
    %v1211 = vpack.c.bf16 %v1198, %v1197
    %v1212 = vpack.c.bf16 %v1200, %v1199
    %v1213 = vpack.c.bf16 %v1202, %v1201
    %v1214 = vpack.c.bf16 %v1204, %v1203
    %v1215 = vpack.c.bf16 %v1206, %v1205
    %v1216 = vpack.c.bf16 %v1208, %v1207
    %1217 = vst [vmem:[#allocation3 + $0x180] sm:$0xff] %v1209
    %1218 = vst [vmem:[#allocation3 + $0x188] sm:$0xff] %v1210
    %1219 = vst [vmem:[#allocation3 + $0x190] sm:$0xff] %v1211
    %1220 = vst [vmem:[#allocation3 + $0x198] sm:$0xff] %v1212
    %1221 = vst [vmem:[#allocation3 + $0x1a0] sm:$0xff] %v1213
    %1222 = vst [vmem:[#allocation3 + $0x1a8] sm:$0xff] %v1214
    %1223 = vst [vmem:[#allocation3 + $0x1b0] sm:$0xff] %v1215
    %1224 = vst [vmem:[#allocation3 + $0x1b8] sm:$0xff] %v1216
    %1225 = vrot.lane.b32.xlu0 %v627, 112
    %v1226 = vpop.permute.xlu0 %1225
    %1227 = vrot.lane.b32.xlu0 %v631, 112
    %v1228 = vpop.permute.xlu0 %1227
    %1229 = vrot.lane.b32.xlu0 %v635, 112
    %v1230 = vpop.permute.xlu0 %1229
    %1231 = vrot.lane.b32.xlu0 %v639, 112
    %v1232 = vpop.permute.xlu0 %1231
    %1233 = vrot.lane.b32.xlu0 %v628, 112
    %v1234 = vpop.permute.xlu0 %1233
    %1235 = vrot.lane.b32.xlu0 %v632, 112
    %v1236 = vpop.permute.xlu0 %1235
    %1237 = vrot.lane.b32.xlu0 %v636, 112
    %v1238 = vpop.permute.xlu0 %1237
    %1239 = vrot.lane.b32.xlu0 %v640, 112
    %v1240 = vpop.permute.xlu0 %1239
    %1241 = vrot.lane.b32.xlu0 %v629, 112
    %v1242 = vpop.permute.xlu0 %1241
    %1243 = vrot.lane.b32.xlu0 %v633, 112
    %v1244 = vpop.permute.xlu0 %1243
    %1245 = vrot.lane.b32.xlu0 %v637, 112
    %v1246 = vpop.permute.xlu0 %1245
    %1247 = vrot.lane.b32.xlu0 %v641, 112
    %v1248 = vpop.permute.xlu0 %1247
    %1249 = vrot.lane.b32.xlu0 %v630, 112
    %v1250 = vpop.permute.xlu0 %1249
    %1251 = vrot.lane.b32.xlu0 %v634, 112
    %v1252 = vpop.permute.xlu0 %1251
    %1253 = vrot.lane.b32.xlu0 %v638, 112
    %v1254 = vpop.permute.xlu0 %1253
    %1255 = vrot.lane.b32.xlu0 %v642, 112
    %v1256 = vpop.permute.xlu0 %1255
    %v1257 = vsel %vm382, %v1242, %v1250
    %v1258 = vsel %vm382, %v1244, %v1252
    %v1259 = vsel %vm382, %v1246, %v1254
    %v1260 = vsel %vm382, %v1248, %v1256
    %v1261 = vsel %vm382, %v1234, %v1242
    %v1262 = vsel %vm382, %v1236, %v1244
    %v1263 = vsel %vm382, %v1238, %v1246
    %v1264 = vsel %vm382, %v1240, %v1248
    %v1265 = vsel %vm382, %v1226, %v1234
    %v1266 = vsel %vm382, %v1228, %v1236
    %v1267 = vsel %vm382, %v1230, %v1238
    %v1268 = vsel %vm382, %v1232, %v1240
    %v1269 = vsel %vm382, %v1250, %v1226
    %v1270 = vsel %vm382, %v1252, %v1228
    %v1271 = vsel %vm382, %v1254, %v1230
    %v1272 = vsel %vm382, %v1256, %v1232
    %v1273 = vld [vmem:[%s387] ss:$8 sm:$0xf]
    %v1275 = vperm.slane %v1273, 0
    %v1276 = vperm.slane %v1273, 1
    %v1277 = vperm.slane %v1273, 2
    %v1278 = vperm.slane %v1273, 3
    %v1283 = vmul.f32 %v1265, %v1275
    %v1284 = vmul.f32 %v1261, %v1276
    %v1285 = vmul.f32 %v1257, %v1277
    %v1286 = vmul.f32 %v1269, %v1278
    %v1287 = vmul.f32 %v1266, %v1275
    %v1288 = vmul.f32 %v1262, %v1276
    %v1289 = vmul.f32 %v1258, %v1277
    %v1290 = vmul.f32 %v1270, %v1278
    %v1291 = vmul.f32 %v1267, %v1275
    %v1292 = vmul.f32 %v1263, %v1276
    %v1293 = vmul.f32 %v1259, %v1277
    %v1294 = vmul.f32 %v1271, %v1278
    %v1295 = vmul.f32 %v1268, %v1275
    %v1296 = vmul.f32 %v1264, %v1276
    %v1297 = vmul.f32 %v1260, %v1277
    %v1298 = vmul.f32 %v1272, %v1278
    %v1299 = vpack.c.bf16 %v1284, %v1283
    %v1300 = vpack.c.bf16 %v1286, %v1285
    %v1301 = vpack.c.bf16 %v1288, %v1287
    %v1302 = vpack.c.bf16 %v1290, %v1289
    %v1303 = vpack.c.bf16 %v1292, %v1291
    %v1304 = vpack.c.bf16 %v1294, %v1293
    %v1305 = vpack.c.bf16 %v1296, %v1295
    %v1306 = vpack.c.bf16 %v1298, %v1297
    %1307 = vst [vmem:[#allocation3 + $0x1c0] sm:$0xff] %v1299
    %1308 = vst [vmem:[#allocation3 + $0x1c8] sm:$0xff] %v1300
    %1309 = vst [vmem:[#allocation3 + $0x1d0] sm:$0xff] %v1301
    %1310 = vst [vmem:[#allocation3 + $0x1d8] sm:$0xff] %v1302
    %1311 = vst [vmem:[#allocation3 + $0x1e0] sm:$0xff] %v1303
    %1312 = vst [vmem:[#allocation3 + $0x1e8] sm:$0xff] %v1304
    %1313 = vst [vmem:[#allocation3 + $0x1f0] sm:$0xff] %v1305
    %1314 = vst [vmem:[#allocation3 + $0x1f8] sm:$0xff] %v1306
    %1315 = vrot.lane.b32.xlu0 %v627, 111
    %v1316 = vpop.permute.xlu0 %1315
    %1317 = vrot.lane.b32.xlu0 %v631, 111
    %v1318 = vpop.permute.xlu0 %1317
    %1319 = vrot.lane.b32.xlu0 %v635, 111
    %v1320 = vpop.permute.xlu0 %1319
    %1321 = vrot.lane.b32.xlu0 %v639, 111
    %v1322 = vpop.permute.xlu0 %1321
    %1323 = vrot.lane.b32.xlu0 %v628, 111
    %v1324 = vpop.permute.xlu0 %1323
    %1325 = vrot.lane.b32.xlu0 %v632, 111
    %v1326 = vpop.permute.xlu0 %1325
    %1327 = vrot.lane.b32.xlu0 %v636, 111
    %v1328 = vpop.permute.xlu0 %1327
    %1329 = vrot.lane.b32.xlu0 %v640, 111
    %v1330 = vpop.permute.xlu0 %1329
    %1331 = vrot.lane.b32.xlu0 %v629, 111
    %v1332 = vpop.permute.xlu0 %1331
    %1333 = vrot.lane.b32.xlu0 %v633, 111
    %v1334 = vpop.permute.xlu0 %1333
    %1335 = vrot.lane.b32.xlu0 %v637, 111
    %v1336 = vpop.permute.xlu0 %1335
    %1337 = vrot.lane.b32.xlu0 %v641, 111
    %v1338 = vpop.permute.xlu0 %1337
    %1339 = vrot.lane.b32.xlu0 %v630, 111
    %v1340 = vpop.permute.xlu0 %1339
    %1341 = vrot.lane.b32.xlu0 %v634, 111
    %v1342 = vpop.permute.xlu0 %1341
    %1343 = vrot.lane.b32.xlu0 %v638, 111
    %v1344 = vpop.permute.xlu0 %1343
    %1345 = vrot.lane.b32.xlu0 %v642, 111
    %v1346 = vpop.permute.xlu0 %1345
    %v1347 = vsel %vm437, %v1332, %v1340
    %v1348 = vsel %vm437, %v1334, %v1342
    %v1349 = vsel %vm437, %v1336, %v1344
    %v1350 = vsel %vm437, %v1338, %v1346
    %v1351 = vsel %vm437, %v1324, %v1332
    %v1352 = vsel %vm437, %v1326, %v1334
    %v1353 = vsel %vm437, %v1328, %v1336
    %v1354 = vsel %vm437, %v1330, %v1338
    %v1355 = vsel %vm437, %v1316, %v1324
    %v1356 = vsel %vm437, %v1318, %v1326
    %v1357 = vsel %vm437, %v1320, %v1328
    %v1358 = vsel %vm437, %v1322, %v1330
    %v1359 = vsel %vm437, %v1340, %v1316
    %v1360 = vsel %vm437, %v1342, %v1318
    %v1361 = vsel %vm437, %v1344, %v1320
    %v1362 = vsel %vm437, %v1346, %v1322
    %v1363 = vld [vmem:[%s442] ss:$8 sm:$0xf]
    %v1365 = vperm.slane %v1363, 0
    %v1366 = vperm.slane %v1363, 1
    %v1367 = vperm.slane %v1363, 2
    %v1368 = vperm.slane %v1363, 3
    %v1373 = vmul.f32 %v1355, %v1365
    %v1374 = vmul.f32 %v1351, %v1366
    %v1375 = vmul.f32 %v1347, %v1367
    %v1376 = vmul.f32 %v1359, %v1368
    %v1377 = vmul.f32 %v1356, %v1365
    %v1378 = vmul.f32 %v1352, %v1366
    %v1379 = vmul.f32 %v1348, %v1367
    %v1380 = vmul.f32 %v1360, %v1368
    %v1381 = vmul.f32 %v1357, %v1365
    %v1382 = vmul.f32 %v1353, %v1366
    %v1383 = vmul.f32 %v1349, %v1367
    %v1384 = vmul.f32 %v1361, %v1368
    %v1385 = vmul.f32 %v1358, %v1365
    %v1386 = vmul.f32 %v1354, %v1366
    %v1387 = vmul.f32 %v1350, %v1367
    %v1388 = vmul.f32 %v1362, %v1368
    %v1389 = vpack.c.bf16 %v1374, %v1373
    %v1390 = vpack.c.bf16 %v1376, %v1375
    %v1391 = vpack.c.bf16 %v1378, %v1377
    %v1392 = vpack.c.bf16 %v1380, %v1379
    %v1393 = vpack.c.bf16 %v1382, %v1381
    %v1394 = vpack.c.bf16 %v1384, %v1383
    %v1395 = vpack.c.bf16 %v1386, %v1385
    %v1396 = vpack.c.bf16 %v1388, %v1387
    %1397 = vst [vmem:[#allocation3 + $0x200] sm:$0xff] %v1389
    %1398 = vst [vmem:[#allocation3 + $0x208] sm:$0xff] %v1390
    %1399 = vst [vmem:[#allocation3 + $0x210] sm:$0xff] %v1391
    %1400 = vst [vmem:[#allocation3 + $0x218] sm:$0xff] %v1392
    %1401 = vst [vmem:[#allocation3 + $0x220] sm:$0xff] %v1393
    %1402 = vst [vmem:[#allocation3 + $0x228] sm:$0xff] %v1394
    %1403 = vst [vmem:[#allocation3 + $0x230] sm:$0xff] %v1395
    %1404 = vst [vmem:[#allocation3 + $0x238] sm:$0xff] %v1396
    %v1405 = vld [vmem:[%s4] sm:$0xff]
    %v1406 = vld [vmem:[%s4 + $0x8] sm:$0xf]
    %v1407 = vld [vmem:[%s4 + $0xc] sm:$0xff]
    %v1408 = vld [vmem:[%s4 + $0x14] sm:$0xf]
    %v1409 = vld [vmem:[%s4 + $0x18] sm:$0xff]
    %v1410 = vld [vmem:[%s4 + $0x20] sm:$0xf]
    %v1411 = vld [vmem:[%s4 + $0x24] sm:$0xff]
    %v1412 = vld [vmem:[%s4 + $0x2c] sm:$0xf]
    %v1413 = vld [vmem:[#allocation3] sm:$0xff]
    %v1414 = vld [vmem:[#allocation3 + $0x8] sm:$0xff]
    %v1415 = vld [vmem:[#allocation3 + $0x10] sm:$0xff]
    %v1416 = vld [vmem:[#allocation3 + $0x18] sm:$0xff]
    %v1417 = vld [vmem:[#allocation3 + $0x20] sm:$0xff]
    %v1418 = vld [vmem:[#allocation3 + $0x28] sm:$0xff]
    %v1419 = vld [vmem:[#allocation3 + $0x30] sm:$0xff]
    %v1420 = vld [vmem:[#allocation3 + $0x38] sm:$0xff]
    %v1421 = vld [vmem:[#allocation3 + $0x40] sm:$0xff]
    %v1422 = vld [vmem:[#allocation3 + $0x48] sm:$0xff]
    %v1423 = vld [vmem:[#allocation3 + $0x50] sm:$0xff]
    %v1424 = vld [vmem:[#allocation3 + $0x58] sm:$0xff]
    %v1425 = vld [vmem:[#allocation3 + $0x60] sm:$0xff]
    %v1426 = vld [vmem:[#allocation3 + $0x68] sm:$0xff]
    %v1427 = vld [vmem:[#allocation3 + $0x70] sm:$0xff]
    %v1428 = vld [vmem:[#allocation3 + $0x78] sm:$0xff]
    %v1429 = vld [vmem:[#allocation3 + $0x80] sm:$0xff]
    %v1430 = vld [vmem:[#allocation3 + $0x88] sm:$0xff]
    %v1431 = vld [vmem:[#allocation3 + $0x90] sm:$0xff]
    %v1432 = vld [vmem:[#allocation3 + $0x98] sm:$0xff]
    %v1433 = vld [vmem:[#allocation3 + $0xa0] sm:$0xff]
    %v1434 = vld [vmem:[#allocation3 + $0xa8] sm:$0xff]
    %v1435 = vld [vmem:[#allocation3 + $0xb0] sm:$0xff]
    %v1436 = vld [vmem:[#allocation3 + $0xb8] sm:$0xff]
    %v1437 = vld [vmem:[#allocation3 + $0xc0] sm:$0xff]
    %v1438 = vld [vmem:[#allocation3 + $0xc8] sm:$0xff]
    %v1439 = vld [vmem:[#allocation3 + $0xd0] sm:$0xff]
    %v1440 = vld [vmem:[#allocation3 + $0xd8] sm:$0xff]
    %v1441 = vld [vmem:[#allocation3 + $0xe0] sm:$0xff]
    %v1442 = vld [vmem:[#allocation3 + $0xe8] sm:$0xff]
    %v1443 = vld [vmem:[#allocation3 + $0xf0] sm:$0xff]
    %v1444 = vld [vmem:[#allocation3 + $0xf8] sm:$0xff]
    %v1445 = vld [vmem:[#allocation3 + $0x100] sm:$0xff]
    %v1446 = vld [vmem:[#allocation3 + $0x108] sm:$0xff]
    %v1447 = vld [vmem:[#allocation3 + $0x110] sm:$0xff]
    %v1448 = vld [vmem:[#allocation3 + $0x118] sm:$0xff]
    %v1449 = vld [vmem:[#allocation3 + $0x120] sm:$0xff]
    %v1450 = vld [vmem:[#allocation3 + $0x128] sm:$0xff]
    %v1451 = vld [vmem:[#allocation3 + $0x130] sm:$0xff]
    %v1452 = vld [vmem:[#allocation3 + $0x138] sm:$0xff]
    %v1453 = vld [vmem:[#allocation3 + $0x140] sm:$0xff]
    %v1454 = vld [vmem:[#allocation3 + $0x148] sm:$0xff]
    %v1455 = vld [vmem:[#allocation3 + $0x150] sm:$0xff]
    %v1456 = vld [vmem:[#allocation3 + $0x158] sm:$0xff]
    %v1457 = vld [vmem:[#allocation3 + $0x160] sm:$0xff]
    %v1458 = vld [vmem:[#allocation3 + $0x168] sm:$0xff]
    %v1459 = vld [vmem:[#allocation3 + $0x170] sm:$0xff]
    %v1460 = vld [vmem:[#allocation3 + $0x178] sm:$0xff]
    %v1461 = vld [vmem:[#allocation3 + $0x180] sm:$0xff]
    %v1462 = vld [vmem:[#allocation3 + $0x188] sm:$0xff]
    %v1463 = vld [vmem:[#allocation3 + $0x190] sm:$0xff]
    %v1464 = vld [vmem:[#allocation3 + $0x198] sm:$0xff]
    %v1465 = vld [vmem:[#allocation3 + $0x1a0] sm:$0xff]
    %v1466 = vld [vmem:[#allocation3 + $0x1a8] sm:$0xff]
    %v1467 = vld [vmem:[#allocation3 + $0x1b0] sm:$0xff]
    %v1468 = vld [vmem:[#allocation3 + $0x1b8] sm:$0xff]
    %v1469 = vld [vmem:[#allocation3 + $0x1c0] sm:$0xff]
    %v1470 = vld [vmem:[#allocation3 + $0x1c8] sm:$0xff]
    %v1471 = vld [vmem:[#allocation3 + $0x1d0] sm:$0xff]
    %v1472 = vld [vmem:[#allocation3 + $0x1d8] sm:$0xff]
    %v1473 = vld [vmem:[#allocation3 + $0x1e0] sm:$0xff]
    %v1474 = vld [vmem:[#allocation3 + $0x1e8] sm:$0xff]
    %v1475 = vld [vmem:[#allocation3 + $0x1f0] sm:$0xff]
    %v1476 = vld [vmem:[#allocation3 + $0x1f8] sm:$0xff]
    %v1477 = vld [vmem:[#allocation3 + $0x200] sm:$0xff]
    %v1478 = vld [vmem:[#allocation3 + $0x208] sm:$0xff]
    %v1479 = vld [vmem:[#allocation3 + $0x210] sm:$0xff]
    %v1480 = vld [vmem:[#allocation3 + $0x218] sm:$0xff]
    %v1481 = vld [vmem:[#allocation3 + $0x220] sm:$0xff]
    %v1482 = vld [vmem:[#allocation3 + $0x228] sm:$0xff]
    %v1483 = vld [vmem:[#allocation3 + $0x230] sm:$0xff]
    %v1484 = vld [vmem:[#allocation3 + $0x238] sm:$0xff]
    %v1485 = vld [vmem:[%s5] sm:$0xff]
    %v1486 = vld [vmem:[%s5 + $0x8] sm:$0xff]
    %v1487 = vld [vmem:[%s5 + $0x10] sm:$0xff]
    %v1488 = vld [vmem:[%s5 + $0x18] sm:$0xff]
    %1490 = vset.pattern.permute.xlu0 0
    %1491 = vperm.xlu0 %1490, %v1485
    %v1492 = vpop.permute.xlu0 %1491
    %1495 = vset.pattern.permute.xlu0 0
    %1496 = vperm.xlu0 %1495, %v1486
    %v1497 = vpop.permute.xlu0 %1496
    %1500 = vset.pattern.permute.xlu0 0
    %1501 = vperm.xlu0 %1500, %v1487
    %v1502 = vpop.permute.xlu0 %1501
    %1505 = vset.pattern.permute.xlu0 0
    %1506 = vperm.xlu0 %1505, %v1488
    %v1507 = vpop.permute.xlu0 %1506
    %v1517 = vunpack.c.l.b16 %v1405
    %v1518 = vunpack.c.h.b16 %v1405
    %v1519 = vunpack.c.l.b16 %v1406
    %v1520 = vunpack.c.l.b16 %v1407
    %v1521 = vunpack.c.h.b16 %v1407
    %v1522 = vunpack.c.l.b16 %v1408
    %v1523 = vunpack.c.l.b16 %v1409
    %v1524 = vunpack.c.h.b16 %v1409
    %v1525 = vunpack.c.l.b16 %v1410
    %v1526 = vunpack.c.l.b16 %v1411
    %v1527 = vunpack.c.h.b16 %v1411
    %v1528 = vunpack.c.l.b16 %v1412
    %v1529 = vpack.c.b16 %v1520, %v1517
    %v1530 = vpack.c.b16 %v1521, %v1518
    %v1531 = vpack.c.b16 %v1522, %v1519
    %v1532 = vpack.c.b16 %v1526, %v1523
    %v1533 = vpack.c.b16 %v1527, %v1524
    %v1534 = vpack.c.b16 %v1528, %v1525
    %v1611 = vunpack.c.l.b16 %v1413
    %v1612 = vunpack.c.h.b16 %v1413
    %v1613 = vunpack.c.l.b16 %v1414
    %v1614 = vunpack.c.h.b16 %v1414
    %v1615 = vunpack.c.l.b16 %v1415
    %v1616 = vunpack.c.h.b16 %v1415
    %v1617 = vunpack.c.l.b16 %v1416
    %v1618 = vunpack.c.h.b16 %v1416
    %v1619 = vunpack.c.l.b16 %v1417
    %v1620 = vunpack.c.h.b16 %v1417
    %v1621 = vunpack.c.l.b16 %v1418
    %v1622 = vunpack.c.h.b16 %v1418
    %v1623 = vunpack.c.l.b16 %v1419
    %v1624 = vunpack.c.h.b16 %v1419
    %v1625 = vunpack.c.l.b16 %v1420
    %v1626 = vunpack.c.h.b16 %v1420
    %v1627 = vunpack.c.l.b16 %v1421
    %v1628 = vunpack.c.h.b16 %v1421
    %v1629 = vunpack.c.l.b16 %v1422
    %v1630 = vunpack.c.h.b16 %v1422
    %v1631 = vunpack.c.l.b16 %v1423
    %v1632 = vunpack.c.h.b16 %v1423
    %v1633 = vunpack.c.l.b16 %v1424
    %v1634 = vunpack.c.h.b16 %v1424
    %v1635 = vunpack.c.l.b16 %v1425
    %v1636 = vunpack.c.h.b16 %v1425
    %v1637 = vunpack.c.l.b16 %v1426
    %v1638 = vunpack.c.h.b16 %v1426
    %v1639 = vunpack.c.l.b16 %v1427
    %v1640 = vunpack.c.h.b16 %v1427
    %v1641 = vunpack.c.l.b16 %v1428
    %v1642 = vunpack.c.h.b16 %v1428
    %v1643 = vunpack.c.l.b16 %v1429
    %v1644 = vunpack.c.h.b16 %v1429
    %v1645 = vunpack.c.l.b16 %v1430
    %v1646 = vunpack.c.h.b16 %v1430
    %v1647 = vunpack.c.l.b16 %v1431
    %v1648 = vunpack.c.h.b16 %v1431
    %v1649 = vunpack.c.l.b16 %v1432
    %v1650 = vunpack.c.h.b16 %v1432
    %v1651 = vunpack.c.l.b16 %v1433
    %v1652 = vunpack.c.h.b16 %v1433
    %v1653 = vunpack.c.l.b16 %v1434
    %v1654 = vunpack.c.h.b16 %v1434
    %v1655 = vunpack.c.l.b16 %v1435
    %v1656 = vunpack.c.h.b16 %v1435
    %v1657 = vunpack.c.l.b16 %v1436
    %v1658 = vunpack.c.h.b16 %v1436
    %v1659 = vunpack.c.l.b16 %v1437
    %v1660 = vunpack.c.h.b16 %v1437
    %v1661 = vunpack.c.l.b16 %v1438
    %v1662 = vunpack.c.h.b16 %v1438
    %v1663 = vunpack.c.l.b16 %v1439
    %v1664 = vunpack.c.h.b16 %v1439
    %v1665 = vunpack.c.l.b16 %v1440
    %v1666 = vunpack.c.h.b16 %v1440
    %v1667 = vunpack.c.l.b16 %v1441
    %v1668 = vunpack.c.h.b16 %v1441
    %v1669 = vunpack.c.l.b16 %v1442
    %v1670 = vunpack.c.h.b16 %v1442
    %v1671 = vunpack.c.l.b16 %v1443
    %v1672 = vunpack.c.h.b16 %v1443
    %v1673 = vunpack.c.l.b16 %v1444
    %v1674 = vunpack.c.h.b16 %v1444
    %v1675 = vunpack.c.l.b16 %v1445
    %v1676 = vunpack.c.h.b16 %v1445
    %v1677 = vunpack.c.l.b16 %v1446
    %v1678 = vunpack.c.h.b16 %v1446
    %v1679 = vunpack.c.l.b16 %v1447
    %v1680 = vunpack.c.h.b16 %v1447
    %v1681 = vunpack.c.l.b16 %v1448
    %v1682 = vunpack.c.h.b16 %v1448
    %v1683 = vunpack.c.l.b16 %v1449
    %v1684 = vunpack.c.h.b16 %v1449
    %v1685 = vunpack.c.l.b16 %v1450
    %v1686 = vunpack.c.h.b16 %v1450
    %v1687 = vunpack.c.l.b16 %v1451
    %v1688 = vunpack.c.h.b16 %v1451
    %v1689 = vunpack.c.l.b16 %v1452
    %v1690 = vunpack.c.h.b16 %v1452
    %v1691 = vunpack.c.l.b16 %v1453
    %v1692 = vunpack.c.h.b16 %v1453
    %v1693 = vunpack.c.l.b16 %v1454
    %v1694 = vunpack.c.h.b16 %v1454
    %v1695 = vunpack.c.l.b16 %v1455
    %v1696 = vunpack.c.h.b16 %v1455
    %v1697 = vunpack.c.l.b16 %v1456
    %v1698 = vunpack.c.h.b16 %v1456
    %v1699 = vunpack.c.l.b16 %v1457
    %v1700 = vunpack.c.h.b16 %v1457
    %v1701 = vunpack.c.l.b16 %v1458
    %v1702 = vunpack.c.h.b16 %v1458
    %v1703 = vunpack.c.l.b16 %v1459
    %v1704 = vunpack.c.h.b16 %v1459
    %v1705 = vunpack.c.l.b16 %v1460
    %v1706 = vunpack.c.h.b16 %v1460
    %v1707 = vunpack.c.l.b16 %v1461
    %v1708 = vunpack.c.h.b16 %v1461
    %v1709 = vunpack.c.l.b16 %v1462
    %v1710 = vunpack.c.h.b16 %v1462
    %v1711 = vunpack.c.l.b16 %v1463
    %v1712 = vunpack.c.h.b16 %v1463
    %v1713 = vunpack.c.l.b16 %v1464
    %v1714 = vunpack.c.h.b16 %v1464
    %v1715 = vunpack.c.l.b16 %v1465
    %v1716 = vunpack.c.h.b16 %v1465
    %v1717 = vunpack.c.l.b16 %v1466
    %v1718 = vunpack.c.h.b16 %v1466
    %v1719 = vunpack.c.l.b16 %v1467
    %v1720 = vunpack.c.h.b16 %v1467
    %v1721 = vunpack.c.l.b16 %v1468
    %v1722 = vunpack.c.h.b16 %v1468
    %v1723 = vunpack.c.l.b16 %v1469
    %v1724 = vunpack.c.h.b16 %v1469
    %v1725 = vunpack.c.l.b16 %v1470
    %v1726 = vunpack.c.h.b16 %v1470
    %v1727 = vunpack.c.l.b16 %v1471
    %v1728 = vunpack.c.h.b16 %v1471
    %v1729 = vunpack.c.l.b16 %v1472
    %v1730 = vunpack.c.h.b16 %v1472
    %v1731 = vunpack.c.l.b16 %v1473
    %v1732 = vunpack.c.h.b16 %v1473
    %v1733 = vunpack.c.l.b16 %v1474
    %v1734 = vunpack.c.h.b16 %v1474
    %v1735 = vunpack.c.l.b16 %v1475
    %v1736 = vunpack.c.h.b16 %v1475
    %v1737 = vunpack.c.l.b16 %v1476
    %v1738 = vunpack.c.h.b16 %v1476
    %v1739 = vunpack.c.l.b16 %v1477
    %v1740 = vunpack.c.h.b16 %v1477
    %v1741 = vunpack.c.l.b16 %v1478
    %v1742 = vunpack.c.h.b16 %v1478
    %v1743 = vunpack.c.l.b16 %v1479
    %v1744 = vunpack.c.h.b16 %v1479
    %v1745 = vunpack.c.l.b16 %v1480
    %v1746 = vunpack.c.h.b16 %v1480
    %v1747 = vunpack.c.l.b16 %v1481
    %v1748 = vunpack.c.h.b16 %v1481
    %v1749 = vunpack.c.l.b16 %v1482
    %v1750 = vunpack.c.h.b16 %v1482
    %v1751 = vunpack.c.l.b16 %v1483
    %v1752 = vunpack.c.h.b16 %v1483
    %v1753 = vunpack.c.l.b16 %v1484
    %v1754 = vunpack.c.h.b16 %v1484
    %v1755 = vpack.c.b16 %v1615, %v1611
    %v1756 = vpack.c.b16 %v1616, %v1612
    %v1757 = vpack.c.b16 %v1617, %v1613
    %v1758 = vpack.c.b16 %v1618, %v1614
    %v1759 = vpack.c.b16 %v1623, %v1619
    %v1760 = vpack.c.b16 %v1624, %v1620
    %v1761 = vpack.c.b16 %v1625, %v1621
    %v1762 = vpack.c.b16 %v1626, %v1622
    %v1763 = vpack.c.b16 %v1631, %v1627
    %v1764 = vpack.c.b16 %v1632, %v1628
    %v1765 = vpack.c.b16 %v1633, %v1629
    %v1766 = vpack.c.b16 %v1634, %v1630
    %v1767 = vpack.c.b16 %v1639, %v1635
    %v1768 = vpack.c.b16 %v1640, %v1636
    %v1769 = vpack.c.b16 %v1641, %v1637
    %v1770 = vpack.c.b16 %v1642, %v1638
    %v1771 = vpack.c.b16 %v1647, %v1643
    %v1772 = vpack.c.b16 %v1648, %v1644
    %v1773 = vpack.c.b16 %v1649, %v1645
    %v1774 = vpack.c.b16 %v1650, %v1646
    %v1775 = vpack.c.b16 %v1655, %v1651
    %v1776 = vpack.c.b16 %v1656, %v1652
    %v1777 = vpack.c.b16 %v1657, %v1653
    %v1778 = vpack.c.b16 %v1658, %v1654
    %v1779 = vpack.c.b16 %v1663, %v1659
    %v1780 = vpack.c.b16 %v1664, %v1660
    %v1781 = vpack.c.b16 %v1665, %v1661
    %v1782 = vpack.c.b16 %v1666, %v1662
    %v1783 = vpack.c.b16 %v1671, %v1667
    %v1784 = vpack.c.b16 %v1672, %v1668
    %v1785 = vpack.c.b16 %v1673, %v1669
    %v1786 = vpack.c.b16 %v1674, %v1670
    %v1787 = vpack.c.b16 %v1679, %v1675
    %v1788 = vpack.c.b16 %v1680, %v1676
    %v1789 = vpack.c.b16 %v1681, %v1677
    %v1790 = vpack.c.b16 %v1682, %v1678
    %v1791 = vpack.c.b16 %v1687, %v1683
    %v1792 = vpack.c.b16 %v1688, %v1684
    %v1793 = vpack.c.b16 %v1689, %v1685
    %v1794 = vpack.c.b16 %v1690, %v1686
    %v1795 = vpack.c.b16 %v1695, %v1691
    %v1796 = vpack.c.b16 %v1696, %v1692
    %v1797 = vpack.c.b16 %v1697, %v1693
    %v1798 = vpack.c.b16 %v1698, %v1694
    %v1799 = vpack.c.b16 %v1703, %v1699
    %v1800 = vpack.c.b16 %v1704, %v1700
    %v1801 = vpack.c.b16 %v1705, %v1701
    %v1802 = vpack.c.b16 %v1706, %v1702
    %v1803 = vpack.c.b16 %v1711, %v1707
    %v1804 = vpack.c.b16 %v1712, %v1708
    %v1805 = vpack.c.b16 %v1713, %v1709
    %v1806 = vpack.c.b16 %v1714, %v1710
    %v1807 = vpack.c.b16 %v1719, %v1715
    %v1808 = vpack.c.b16 %v1720, %v1716
    %v1809 = vpack.c.b16 %v1721, %v1717
    %v1810 = vpack.c.b16 %v1722, %v1718
    %v1811 = vpack.c.b16 %v1727, %v1723
    %v1812 = vpack.c.b16 %v1728, %v1724
    %v1813 = vpack.c.b16 %v1729, %v1725
    %v1814 = vpack.c.b16 %v1730, %v1726
    %v1815 = vpack.c.b16 %v1735, %v1731
    %v1816 = vpack.c.b16 %v1736, %v1732
    %v1817 = vpack.c.b16 %v1737, %v1733
    %v1818 = vpack.c.b16 %v1738, %v1734
    %v1819 = vpack.c.b16 %v1743, %v1739
    %v1820 = vpack.c.b16 %v1744, %v1740
    %v1821 = vpack.c.b16 %v1745, %v1741
    %v1822 = vpack.c.b16 %v1746, %v1742
    %v1823 = vpack.c.b16 %v1751, %v1747
    %v1824 = vpack.c.b16 %v1752, %v1748
    %v1825 = vpack.c.b16 %v1753, %v1749
    %v1826 = vpack.c.b16 %v1754, %v1750
    %vm1899 = vcmask 261120
    %v1901 = vsel %vm1899, %v1531, 0
    %v1904 = vsel %vm1899, %v1534, 0
    %1906 = vmatpush.bf16.msra.mxu0 %v1783
    %1907 = vmatpush.bf16.msra.mxu0 %v1779
    %1908 = vmatpush.bf16.msra.mxu0 %v1775
    %1909 = vmatpush.bf16.msra.mxu0 %v1771
    %1910 = vmatpush.bf16.msra.mxu0 %v1767
    %1911 = vmatpush.bf16.msra.mxu0 %v1763
    %1912 = vmatpush.bf16.msra.mxu0 %v1759
    %1913 = vmatpush.bf16.msra.mxu0 %v1755
    %1914 = vmatmul.bf16.gmra.mxu0 %v1529
    %v1915 = vpop.f32.mrf.mxu0
    %v1916 = vadd.f32 %v1492, %v1915
    %v1917 = vpop.f32.mrf.mxu0
    %v1918 = vadd.f32 %v1497, %v1917
    %1919 = vmatmul.bf16.gmra.mxu0 %v1532
    %v1920 = vpop.f32.mrf.mxu0
    %v1921 = vadd.f32 %v1502, %v1920
    %v1922 = vpop.f32.mrf.mxu0
    %v1923 = vadd.f32 %v1507, %v1922
    %1924 = vdwg.mxu0
    %1925 = vmatpush.bf16.msra.mxu0 %v1815
    %1926 = vmatpush.bf16.msra.mxu0 %v1811
    %1927 = vmatpush.bf16.msra.mxu0 %v1807
    %1928 = vmatpush.bf16.msra.mxu0 %v1803
    %1929 = vmatpush.bf16.msra.mxu0 %v1799
    %1930 = vmatpush.bf16.msra.mxu0 %v1795
    %1931 = vmatpush.bf16.msra.mxu0 %v1791
    %1932 = vmatpush.bf16.msra.mxu0 %v1787
    %1933 = vmatmul.bf16.gmra.mxu0 %v1530
    %v1934 = vpop.f32.mrf.mxu0
    %v1935 = vadd.f32 %v1916, %v1934
    %v1936 = vpop.f32.mrf.mxu0
    %v1937 = vadd.f32 %v1918, %v1936
    %1938 = vmatmul.bf16.gmra.mxu0 %v1533
    %v1939 = vpop.f32.mrf.mxu0
    %v1940 = vadd.f32 %v1921, %v1939
    %v1941 = vpop.f32.mrf.mxu0
    %v1942 = vadd.f32 %v1923, %v1941
    %1943 = vdwg.mxu0
    %1944 = vmatpush.bf16.msra.mxu0 0
    %1945 = vmatpush.bf16.msra.mxu0 0
    %1946 = vmatpush.bf16.msra.mxu0 0
    %1947 = vmatpush.bf16.msra.mxu0 0
    %1948 = vmatpush.bf16.msra.mxu0 0
    %1949 = vmatpush.bf16.msra.mxu0 0
    %1950 = vmatpush.bf16.msra.mxu0 %v1823
    %1951 = vmatpush.bf16.msra.mxu0 %v1819
    %1952 = vmatmul.bf16.gmra.mxu0 %v1901
    %v1953 = vpop.f32.mrf.mxu0
    %v1954 = vadd.f32 %v1935, %v1953
    %v1955 = vpop.f32.mrf.mxu0
    %v1956 = vadd.f32 %v1937, %v1955
    %1957 = vmatmul.bf16.gmra.mxu0 %v1904
    %v1958 = vpop.f32.mrf.mxu0
    %v1959 = vadd.f32 %v1940, %v1958
    %v1960 = vpop.f32.mrf.mxu0
    %v1961 = vadd.f32 %v1942, %v1960
    %1962 = vdwg.mxu0
    %1963 = vmatpush.bf16.msra.mxu0 %v1784
    %1964 = vmatpush.bf16.msra.mxu0 %v1780
    %1965 = vmatpush.bf16.msra.mxu0 %v1776
    %1966 = vmatpush.bf16.msra.mxu0 %v1772
    %1967 = vmatpush.bf16.msra.mxu0 %v1768
    %1968 = vmatpush.bf16.msra.mxu0 %v1764
    %1969 = vmatpush.bf16.msra.mxu0 %v1760
    %1970 = vmatpush.bf16.msra.mxu0 %v1756
    %1971 = vmatmul.bf16.gmra.mxu0 %v1529
    %v1972 = vpop.f32.mrf.mxu0
    %v1973 = vadd.f32 %v1492, %v1972
    %v1974 = vpop.f32.mrf.mxu0
    %v1975 = vadd.f32 %v1497, %v1974
    %1976 = vmatmul.bf16.gmra.mxu0 %v1532
    %v1977 = vpop.f32.mrf.mxu0
    %v1978 = vadd.f32 %v1502, %v1977
    %v1979 = vpop.f32.mrf.mxu0
    %v1980 = vadd.f32 %v1507, %v1979
    %1981 = vdwg.mxu0
    %1982 = vmatpush.bf16.msra.mxu0 %v1816
    %1983 = vmatpush.bf16.msra.mxu0 %v1812
    %1984 = vmatpush.bf16.msra.mxu0 %v1808
    %1985 = vmatpush.bf16.msra.mxu0 %v1804
    %1986 = vmatpush.bf16.msra.mxu0 %v1800
    %1987 = vmatpush.bf16.msra.mxu0 %v1796
    %1988 = vmatpush.bf16.msra.mxu0 %v1792
    %1989 = vmatpush.bf16.msra.mxu0 %v1788
    %1990 = vmatmul.bf16.gmra.mxu0 %v1530
    %v1991 = vpop.f32.mrf.mxu0
    %v1992 = vadd.f32 %v1973, %v1991
    %v1993 = vpop.f32.mrf.mxu0
    %v1994 = vadd.f32 %v1975, %v1993
    %1995 = vmatmul.bf16.gmra.mxu0 %v1533
    %v1996 = vpop.f32.mrf.mxu0
    %v1997 = vadd.f32 %v1978, %v1996
    %v1998 = vpop.f32.mrf.mxu0
    %v1999 = vadd.f32 %v1980, %v1998
    %2000 = vdwg.mxu0
    %2001 = vmatpush.bf16.msra.mxu0 0
    %2002 = vmatpush.bf16.msra.mxu0 0
    %2003 = vmatpush.bf16.msra.mxu0 0
    %2004 = vmatpush.bf16.msra.mxu0 0
    %2005 = vmatpush.bf16.msra.mxu0 0
    %2006 = vmatpush.bf16.msra.mxu0 0
    %2007 = vmatpush.bf16.msra.mxu0 %v1824
    %2008 = vmatpush.bf16.msra.mxu0 %v1820
    %2009 = vmatmul.bf16.gmra.mxu0 %v1901
    %v2010 = vpop.f32.mrf.mxu0
    %v2011 = vadd.f32 %v1992, %v2010
    %v2012 = vpop.f32.mrf.mxu0
    %v2013 = vadd.f32 %v1994, %v2012
    %2014 = vmatmul.bf16.gmra.mxu0 %v1904
    %v2015 = vpop.f32.mrf.mxu0
    %v2016 = vadd.f32 %v1997, %v2015
    %v2017 = vpop.f32.mrf.mxu0
    %v2018 = vadd.f32 %v1999, %v2017
    %2019 = vdwg.mxu0
    %2020 = vmatpush.bf16.msra.mxu0 %v1785
    %2021 = vmatpush.bf16.msra.mxu0 %v1781
    %2022 = vmatpush.bf16.msra.mxu0 %v1777
    %2023 = vmatpush.bf16.msra.mxu0 %v1773
    %2024 = vmatpush.bf16.msra.mxu0 %v1769
    %2025 = vmatpush.bf16.msra.mxu0 %v1765
    %2026 = vmatpush.bf16.msra.mxu0 %v1761
    %2027 = vmatpush.bf16.msra.mxu0 %v1757
    %2028 = vmatmul.bf16.gmra.mxu0 %v1529
    %v2029 = vpop.f32.mrf.mxu0
    %v2030 = vadd.f32 %v1492, %v2029
    %v2031 = vpop.f32.mrf.mxu0
    %v2032 = vadd.f32 %v1497, %v2031
    %2033 = vmatmul.bf16.gmra.mxu0 %v1532
    %v2034 = vpop.f32.mrf.mxu0
    %v2035 = vadd.f32 %v1502, %v2034
    %v2036 = vpop.f32.mrf.mxu0
    %v2037 = vadd.f32 %v1507, %v2036
    %2038 = vdwg.mxu0
    %2039 = vmatpush.bf16.msra.mxu0 %v1817
    %2040 = vmatpush.bf16.msra.mxu0 %v1813
    %2041 = vmatpush.bf16.msra.mxu0 %v1809
    %2042 = vmatpush.bf16.msra.mxu0 %v1805
    %2043 = vmatpush.bf16.msra.mxu0 %v1801
    %2044 = vmatpush.bf16.msra.mxu0 %v1797
    %2045 = vmatpush.bf16.msra.mxu0 %v1793
    %2046 = vmatpush.bf16.msra.mxu0 %v1789
    %2047 = vmatmul.bf16.gmra.mxu0 %v1530
    %v2048 = vpop.f32.mrf.mxu0
    %v2049 = vadd.f32 %v2030, %v2048
    %v2050 = vpop.f32.mrf.mxu0
    %v2051 = vadd.f32 %v2032, %v2050
    %2052 = vmatmul.bf16.gmra.mxu0 %v1533
    %v2053 = vpop.f32.mrf.mxu0
    %v2054 = vadd.f32 %v2035, %v2053
    %v2055 = vpop.f32.mrf.mxu0
    %v2056 = vadd.f32 %v2037, %v2055
    %2057 = vdwg.mxu0
    %2058 = vmatpush.bf16.msra.mxu0 0
    %2059 = vmatpush.bf16.msra.mxu0 0
    %2060 = vmatpush.bf16.msra.mxu0 0
    %2061 = vmatpush.bf16.msra.mxu0 0
    %2062 = vmatpush.bf16.msra.mxu0 0
    %2063 = vmatpush.bf16.msra.mxu0 0
    %2064 = vmatpush.bf16.msra.mxu0 %v1825
    %2065 = vmatpush.bf16.msra.mxu0 %v1821
    %2066 = vmatmul.bf16.gmra.mxu0 %v1901
    %v2067 = vpop.f32.mrf.mxu0
    %v2068 = vadd.f32 %v2049, %v2067
    %v2069 = vpop.f32.mrf.mxu0
    %v2070 = vadd.f32 %v2051, %v2069
    %2071 = vmatmul.bf16.gmra.mxu0 %v1904
    %v2072 = vpop.f32.mrf.mxu0
    %v2073 = vadd.f32 %v2054, %v2072
    %v2074 = vpop.f32.mrf.mxu0
    %v2075 = vadd.f32 %v2056, %v2074
    %2076 = vdwg.mxu0
    %2077 = vmatpush.bf16.msra.mxu0 %v1786
    %2078 = vmatpush.bf16.msra.mxu0 %v1782
    %2079 = vmatpush.bf16.msra.mxu0 %v1778
    %2080 = vmatpush.bf16.msra.mxu0 %v1774
    %2081 = vmatpush.bf16.msra.mxu0 %v1770
    %2082 = vmatpush.bf16.msra.mxu0 %v1766
    %2083 = vmatpush.bf16.msra.mxu0 %v1762
    %2084 = vmatpush.bf16.msra.mxu0 %v1758
    %2085 = vmatmul.bf16.gmra.mxu0 %v1529
    %v2086 = vpop.f32.mrf.mxu0
    %v2087 = vadd.f32 %v1492, %v2086
    %v2088 = vpop.f32.mrf.mxu0
    %v2089 = vadd.f32 %v1497, %v2088
    %2090 = vmatmul.bf16.gmra.mxu0 %v1532
    %v2091 = vpop.f32.mrf.mxu0
    %v2092 = vadd.f32 %v1502, %v2091
    %v2093 = vpop.f32.mrf.mxu0
    %v2094 = vadd.f32 %v1507, %v2093
    %2095 = vdwg.mxu0
    %2096 = vmatpush.bf16.msra.mxu0 %v1818
    %2097 = vmatpush.bf16.msra.mxu0 %v1814
    %2098 = vmatpush.bf16.msra.mxu0 %v1810
    %2099 = vmatpush.bf16.msra.mxu0 %v1806
    %2100 = vmatpush.bf16.msra.mxu0 %v1802
    %2101 = vmatpush.bf16.msra.mxu0 %v1798
    %2102 = vmatpush.bf16.msra.mxu0 %v1794
    %2103 = vmatpush.bf16.msra.mxu0 %v1790
    %2104 = vmatmul.bf16.gmra.mxu0 %v1530
    %v2105 = vpop.f32.mrf.mxu0
    %v2106 = vadd.f32 %v2087, %v2105
    %v2107 = vpop.f32.mrf.mxu0
    %v2108 = vadd.f32 %v2089, %v2107
    %2109 = vmatmul.bf16.gmra.mxu0 %v1533
    %v2110 = vpop.f32.mrf.mxu0
    %v2111 = vadd.f32 %v2092, %v2110
    %v2112 = vpop.f32.mrf.mxu0
    %v2113 = vadd.f32 %v2094, %v2112
    %2114 = vdwg.mxu0
    %2115 = vmatpush.bf16.msra.mxu0 0
    %2116 = vmatpush.bf16.msra.mxu0 0
    %2117 = vmatpush.bf16.msra.mxu0 0
    %2118 = vmatpush.bf16.msra.mxu0 0
    %2119 = vmatpush.bf16.msra.mxu0 0
    %2120 = vmatpush.bf16.msra.mxu0 0
    %2121 = vmatpush.bf16.msra.mxu0 %v1826
    %2122 = vmatpush.bf16.msra.mxu0 %v1822
    %2123 = vmatmul.bf16.gmra.mxu0 %v1901
    %v2124 = vpop.f32.mrf.mxu0
    %v2125 = vadd.f32 %v2106, %v2124
    %v2126 = vpop.f32.mrf.mxu0
    %v2127 = vadd.f32 %v2108, %v2126
    %2128 = vmatmul.bf16.gmra.mxu0 %v1904
    %v2129 = vpop.f32.mrf.mxu0
    %v2130 = vadd.f32 %v2111, %v2129
    %v2131 = vpop.f32.mrf.mxu0
    %v2132 = vadd.f32 %v2113, %v2131
    %2133 = vdwg.mxu0
    %v2134 = vmax.f32 %v1954, 0.0
    %v2135 = vmax.f32 %v2011, 0.0
    %v2136 = vmax.f32 %v2068, 0.0
    %v2137 = vmax.f32 %v2125, 0.0
    %v2138 = vmax.f32 %v1956, 0.0
    %v2139 = vmax.f32 %v2013, 0.0
    %v2140 = vmax.f32 %v2070, 0.0
    %v2141 = vmax.f32 %v2127, 0.0
    %v2142 = vmax.f32 %v1959, 0.0
    %v2143 = vmax.f32 %v2016, 0.0
    %v2144 = vmax.f32 %v2073, 0.0
    %v2145 = vmax.f32 %v2130, 0.0
    %v2146 = vmax.f32 %v1961, 0.0
    %v2147 = vmax.f32 %v2018, 0.0
    %v2148 = vmax.f32 %v2075, 0.0
    %v2149 = vmax.f32 %v2132, 0.0
    %v2150 = vadd.f32 %v2134, %v2135
    %2151 = vadd.xlane.f32.xlu0 %v2150
    %v2152 = vpop.xlane.xlu0 %2151
    %v2153 = vadd.f32 %v2138, %v2139
    %2154 = vadd.xlane.f32.xlu0 %v2153
    %v2155 = vpop.xlane.xlu0 %2154
    %v2156 = vadd.f32 %v2142, %v2143
    %2157 = vadd.xlane.f32.xlu0 %v2156
    %v2158 = vpop.xlane.xlu0 %2157
    %v2159 = vadd.f32 %v2146, %v2147
    %2160 = vadd.xlane.f32.xlu0 %v2159
    %v2161 = vpop.xlane.xlu0 %2160
    %v2162 = vmul.f32 %v2152, 0.00390625
    %v2163 = vmul.f32 %v2155, 0.00390625
    %v2164 = vmul.f32 %v2158, 0.00390625
    %v2165 = vmul.f32 %v2161, 0.00390625
    %v2166 = vld [vmem:[%s6] sm:$0xff]
    %v2167 = vld [vmem:[%s6 + $0x8] sm:$0xff]
    %v2168 = vld [vmem:[%s6 + $0x10] sm:$0xff]
    %v2169 = vld [vmem:[%s6 + $0x18] sm:$0xff]
    %v2170 = vmul.f32 %v2162, %v2166
    %v2171 = vmul.f32 %v2163, %v2167
    %v2172 = vmul.f32 %v2164, %v2168
    %v2173 = vmul.f32 %v2165, %v2169
    %vm2174 = vcmask 56320
    %v2175 = vsel %vm2174, %v2170, 0.0
    %v2176 = vsel %vm2174, %v2171, 0.0
    %v2177 = vadd.f32 %v2175, %v2176
    %v2178 = vsel %vm2174, %v2172, 0.0
    %v2179 = vadd.f32 %v2177, %v2178
    %v2180 = vsel %vm2174, %v2173, 0.0
    %v2181 = vadd.f32 %v2179, %v2180
    %v2182 = vrot.slane %v2181, 4
    %v2183 = vadd.f32 %v2181, %v2182
    %v2184 = vrot.slane %v2183, 2
    %v2185 = vadd.f32 %v2183, %v2184
    %v2186 = vrot.slane %v2185, 1
    %v2187 = vadd.f32 %v2185, %v2186
    %v2188 = vld [vmem:[%s7] sm:$0x1]
    %v2189 = vadd.f32 %v2187, %v2188
    %vm2190 = vcmask 49152
    %2191 = vst.msk [vmem:[#allocation4] sm:$0x1] %vm2190, %v2189
    %v2192 = vadd.f32 %v2136, %v2137
    %2193 = vadd.xlane.f32.xlu0 %v2192
    %v2194 = vpop.xlane.xlu0 %2193
    %v2195 = vadd.f32 %v2140, %v2141
    %2196 = vadd.xlane.f32.xlu0 %v2195
    %v2197 = vpop.xlane.xlu0 %2196
    %v2198 = vadd.f32 %v2144, %v2145
    %2199 = vadd.xlane.f32.xlu0 %v2198
    %v2200 = vpop.xlane.xlu0 %2199
    %v2201 = vadd.f32 %v2148, %v2149
    %2202 = vadd.xlane.f32.xlu0 %v2201
    %v2203 = vpop.xlane.xlu0 %2202
    %v2204 = vmul.f32 %v2194, 0.00390625
    %v2205 = vmul.f32 %v2197, 0.00390625
    %v2206 = vmul.f32 %v2200, 0.00390625
    %v2207 = vmul.f32 %v2203, 0.00390625
    %v2208 = vld [vmem:[%s6] sm:$0xff]
    %v2209 = vld [vmem:[%s6 + $0x8] sm:$0xff]
    %v2210 = vld [vmem:[%s6 + $0x10] sm:$0xff]
    %v2211 = vld [vmem:[%s6 + $0x18] sm:$0xff]
    %v2212 = vmul.f32 %v2204, %v2208
    %v2213 = vmul.f32 %v2205, %v2209
    %v2214 = vmul.f32 %v2206, %v2210
    %v2215 = vmul.f32 %v2207, %v2211
    %v2216 = vsel %vm2174, %v2212, 0.0
    %v2217 = vsel %vm2174, %v2213, 0.0
    %v2218 = vadd.f32 %v2216, %v2217
    %v2219 = vsel %vm2174, %v2214, 0.0
    %v2220 = vadd.f32 %v2218, %v2219
    %v2221 = vsel %vm2174, %v2215, 0.0
    %v2222 = vadd.f32 %v2220, %v2221
    %v2223 = vrot.slane %v2222, 4
    %v2224 = vadd.f32 %v2222, %v2223
    %v2225 = vrot.slane %v2224, 2
    %v2226 = vadd.f32 %v2224, %v2225
    %v2227 = vrot.slane %v2226, 1
    %v2228 = vadd.f32 %v2226, %v2227
    %v2229 = vld [vmem:[%s7] sm:$0x1]
    %v2230 = vadd.f32 %v2228, %v2229
    %2231 = vst.msk [vmem:[#allocation4 + $0x1] sm:$0x1] %vm2190, %v2230
    // Predicated region
    $region34: #{fer_model_forward.1} parent=1 // pred_check
      _
    $region35: #{fer_model_forward.1} parent=1 // pred_check_branch
      %2233 = sbr.rel (0) target = $region37
    $region36: #{fer_model_forward.1} parent=1 // pred_region
      %2235 = vsyncadd [#allocation5], 0
      %s2237 = sshll.u32 [#allocation4], 4
      %s2238 = int_to_ptr.vmem [resolvable:$true] %s2237
      %s2239 = sshll.u32 %s8, 4
      %s2240 = int_to_ptr.hbm [resolvable:$true] %s2239
      %2242 = dma.vmem_to_hbm [thread:$0]  %s2238, 32, %s2240, [#allocation5]
    $region37: #{fer_model_forward.1} parent=1 // pred_fallthru
      _
    // Predicated region
    $region38: #{fer_model_forward.1} parent=1 // pred_check
      _
    $region39: #{fer_model_forward.1} parent=1 // pred_check_branch
      %2244 = sbr.rel (0) target = $region41
    $region40: #{fer_model_forward.1} parent=1 // pred_region
      %2246 = dma.done [#allocation5], 32
    $region41: #{fer_model_forward.1} parent=1 // pred_fallthru
      _
    %2247 = vsyncpa [#allocation5], 1

</llo_original>
